<compile_context>
chip_gen: v5e
topology: v5e:2x2
jax: 0.10.0
libtpu: 0.0.40
codegen_flags: <defaults>
</compile_context>

<pallas_src>
import jax
import jax.numpy as jnp
import numpy as np
from jax import lax
from jax.experimental import pallas as pl
from jax.experimental.pallas import tpu as pltpu


# ----------------------------------------------------------------------------
# Fused kernel
# ----------------------------------------------------------------------------

def _lenet5_kernel(x_ref, m1_ref, b1_ref, sh1_ref, sw1_ref,
                   m2_ref, b2_ref, sh2_ref, sw2_ref,
                   w1_ref, bb1_ref, w2_ref, bb2_ref, w3_ref, bb3_ref,
                   o_ref, p1_scr, p2_scr):
    f32 = jnp.float32

    # ---- conv1 (1->6, 5x5, VALID) + bias + poly(z) = z*z + z --------------
    # Five row-shifted band matmuls; lane index of the result is ow*6 + oc.
    acc1 = b1_ref[...]                                        # (1, 168)
    for kh in range(5):
        acc1 = acc1 + jnp.dot(x_ref[0, kh:kh + 28, :],        # (28, 32)
                              m1_ref[kh],                     # (32, 168)
                              preferred_element_type=f32)     # -> (28, 168)
    h1 = acc1 * acc1 + acc1                                   # (28, 168)

    # ---- avgpool 2x2: row-pair sum (left) + lane-pair sum (right), *0.25 ---
    p1_scr[...] = 0.25 * jnp.dot(
        jnp.dot(sh1_ref[...], h1, preferred_element_type=f32),   # (14, 168)
        sw1_ref[...], preferred_element_type=f32)                # (14, 84)

    # ---- conv2 (6->16, 5x5, VALID) + bias + poly ---------------------------
    acc2 = b2_ref[...]                                        # (1, 160)
    for kh in range(5):
        acc2 = acc2 + jnp.dot(p1_scr[kh:kh + 10, :],          # (10, 84)
                              m2_ref[kh],                     # (84, 160)
                              preferred_element_type=f32)     # -> (10, 160)
    h2 = acc2 * acc2 + acc2                                   # (10, 160)

    # ---- avgpool 2x2 -------------------------------------------------------
    p2_scr[...] = 0.25 * jnp.dot(
        jnp.dot(sh2_ref[...], h2, preferred_element_type=f32),   # (5, 160)
        sw2_ref[...], preferred_element_type=f32)                # (5, 80)

    # ---- flatten + classifier ---------------------------------------------
    # The NCHW flatten permutation is folded into w1_ref (one 80x128 slice per
    # spatial row h); outputs are padded to 128 lanes so the store is dense.
    z = bb1_ref[...]                                          # (1, 128)
    for h in range(5):
        z = z + jnp.dot(p2_scr[h:h + 1, :], w1_ref[h],
                        preferred_element_type=f32)           # (1, 128)
    z = jnp.dot(z, w2_ref[...], preferred_element_type=f32) + bb2_ref[...]
    z = jnp.dot(z, w3_ref[...], preferred_element_type=f32) + bb3_ref[...]
    o_ref[0] = z                                              # (1, 128)


def _const_spec(shape):
    zeros = (0,) * len(shape)
    return pl.BlockSpec(shape, lambda b: zeros)


def lenet5_forward(x, kp):
    """x: (B, 1, 32, 32) float32; kp: kernel-layout params from prepare_kernel_params."""
    B = x.shape[0]
    x2 = x.reshape(B, 32, 32).astype(jnp.float32)   # C == 1, free reshape

    out = pl.pallas_call(
        _lenet5_kernel,
        out_shape=jax.ShapeDtypeStruct((B, 1, 128), jnp.float32),
        grid=(B,),
        in_specs=[
            pl.BlockSpec((1, 32, 32), lambda b: (b, 0, 0)),
            _const_spec(kp["m1"].shape),
            _const_spec(kp["b1"].shape),
            _const_spec(kp["sh1"].shape),
            _const_spec(kp["sw1"].shape),
            _const_spec(kp["m2"].shape),
            _const_spec(kp["b2"].shape),
            _const_spec(kp["sh2"].shape),
            _const_spec(kp["sw2"].shape),
            _const_spec(kp["w1"].shape),
            _const_spec(kp["bb1"].shape),
            _const_spec(kp["w2"].shape),
            _const_spec(kp["bb2"].shape),
            _const_spec(kp["w3"].shape),
            _const_spec(kp["bb3"].shape),
        ],
        out_specs=pl.BlockSpec((1, 1, 128), lambda b: (b, 0, 0)),
        scratch_shapes=[pltpu.VMEM((14, 84), jnp.float32),
                        pltpu.VMEM((5, 80), jnp.float32)],
        compiler_params=pltpu.CompilerParams(
            dimension_semantics=("parallel",)),
    )(x2, kp["m1"], kp["b1"], kp["sh1"], kp["sw1"],
      kp["m2"], kp["b2"], kp["sh2"], kp["sw2"],
      kp["w1"], kp["bb1"], kp["w2"], kp["bb2"], kp["w3"], kp["bb3"])

    return out[:, 0, :10]


# ----------------------------------------------------------------------------
# Host-side (numpy) parameter preparation -- runs once, outside the traced fwd.
# ----------------------------------------------------------------------------

def prepare_kernel_params(params):
    f32 = np.float32
    K = 5
    w1 = np.asarray(params["conv1_w"], f32)       # (6, 1, 5, 5)
    b1 = np.asarray(params["conv1_b"], f32)       # (6,)
    w2 = np.asarray(params["conv2_w"], f32)       # (16, 6, 5, 5)
    b2 = np.asarray(params["conv2_b"], f32)       # (16,)
    fc1_w = np.asarray(params["fc1_w"], f32)      # (400, 120)  (in, out)
    fc1_b = np.asarray(params["fc1_b"], f32)      # (120,)
    fc2_w = np.asarray(params["fc2_w"], f32)      # (120, 84)
    fc2_b = np.asarray(params["fc2_b"], f32)      # (84,)
    fc3_w = np.asarray(params["fc3_w"], f32)      # (84, 10)
    fc3_b = np.asarray(params["fc3_b"], f32)      # (10,)

    # conv1 band matrices M1[kh]: (W_in=32, OW*OC=28*6); out lane = ow*6 + oc.
    OC1, OW1, W_IN1 = 6, 28, 32
    m1 = np.zeros((K, W_IN1, OW1 * OC1), f32)
    for kh in range(K):
        for ow in range(OW1):
            for kw in range(K):
                m1[kh, ow + kw, ow * OC1:(ow + 1) * OC1] = w1[:, 0, kh, kw]
    b1t = np.tile(b1, OW1)[None, :]               # (1, 168)

    # pool1 selectors: row pairs (14,28), lane pairs per channel (168,84).
    sh1 = np.zeros((14, 28), f32)
    sh1[np.arange(14), 2 * np.arange(14)] = 1.0
    sh1[np.arange(14), 2 * np.arange(14) + 1] = 1.0
    sw1 = np.zeros((OW1 * OC1, (OW1 // 2) * OC1), f32)
    for ow in range(OW1):
        for c in range(OC1):
            sw1[ow * OC1 + c, (ow // 2) * OC1 + c] = 1.0

    # conv2 band matrices M2[kh]: (14*6=84, 10*16=160);
    # input lane = w*6 + c, output lane = ow*16 + oc.
    C2, OC2, OW2 = 6, 16, 10
    m2 = np.zeros((K, 14 * C2, OW2 * OC2), f32)
    for kh in range(K):
        for ow in range(OW2):
            for kw in range(K):
                for c in range(C2):
                    m2[kh, (ow + kw) * C2 + c, ow * OC2:(ow + 1) * OC2] = w2[:, c, kh, kw]
    b2t = np.tile(b2, OW2)[None, :]               # (1, 160)

    # pool2 selectors.
    sh2 = np.zeros((5, 10), f32)
    sh2[np.arange(5), 2 * np.arange(5)] = 1.0
    sh2[np.arange(5), 2 * np.arange(5) + 1] = 1.0
    sw2 = np.zeros((OW2 * OC2, (OW2 // 2) * OC2), f32)
    for ow in range(OW2):
        for c in range(OC2):
            sw2[ow * OC2 + c, (ow // 2) * OC2 + c] = 1.0

    # Classifier: fold the PyTorch flatten order (c*25 + h*5 + w) into fc1,
    # split per spatial row h, and pad all output lanes to 128.
    NP = 128
    w1s = np.zeros((5, 5 * OC2, NP), f32)          # [h, w*16 + c, out]
    for h in range(5):
        for w in range(5):
            for c in range(OC2):
                w1s[h, w * OC2 + c, :120] = fc1_w[c * 25 + h * 5 + w, :]
    bb1 = np.zeros((1, NP), f32)
    bb1[0, :120] = fc1_b
    w2p = np.zeros((NP, NP), f32)
    w2p[:120, :84] = fc2_w
    bb2 = np.zeros((1, NP), f32)
    bb2[0, :84] = fc2_b
    w3p = np.zeros((NP, NP), f32)
    w3p[:84, :10] = fc3_w
    bb3 = np.zeros((1, NP), f32)
    bb3[0, :10] = fc3_b

    kp = dict(m1=m1, b1=b1t, sh1=sh1, sw1=sw1,
              m2=m2, b2=b2t, sh2=sh2, sw2=sw2,
              w1=w1s, bb1=bb1, w2=w2p, bb2=bb2, w3=w3p, bb3=bb3)
    return {k: jnp.asarray(v) for k, v in kp.items()}


# ----------------------------------------------------------------------------
# Pure-JAX reference (uses the original PyTorch-layout params)
# ----------------------------------------------------------------------------

def _ref_forward(x, p):
    def conv(z, w, b):
        y = lax.conv_general_dilated(
            z, w, window_strides=(1, 1), padding="VALID",
            dimension_numbers=("NCHW", "OIHW", "NCHW"))
        return y + b[None, :, None, None]

    def poly(z):
        return z * z + z

    def pool(z):
        s = lax.reduce_window(z, 0.0, lax.add,
                              (1, 1, 2, 2), (1, 1, 2, 2), "VALID")
        return s * 0.25

    z = pool(poly(conv(x, p["conv1_w"], p["conv1_b"])))
    z = pool(poly(conv(z, p["conv2_w"], p["conv2_b"])))
    z = z.reshape(z.shape[0], -1)
    z = z @ p["fc1_w"] + p["fc1_b"]
    z = z @ p["fc2_w"] + p["fc2_b"]
    z = z @ p["fc3_w"] + p["fc3_b"]
    return z


# ----------------------------------------------------------------------------
# main
# ----------------------------------------------------------------------------

def _init_params(key):
    ks = jax.random.split(key, 10)
    return {
        "conv1_w": jax.random.normal(ks[0], (6, 1, 5, 5), jnp.float32) * 0.1,
        "conv1_b": jax.random.normal(ks[1], (6,), jnp.float32) * 0.1,
        "conv2_w": jax.random.normal(ks[2], (16, 6, 5, 5), jnp.float32) * 0.05,
        "conv2_b": jax.random.normal(ks[3], (16,), jnp.float32) * 0.05,
        # Linear weights stored already transposed: (in, out); biases 1-D.
        "fc1_w": jax.random.normal(ks[4], (400, 120), jnp.float32) * 0.05,
        "fc1_b": jax.random.normal(ks[5], (120,), jnp.float32) * 0.05,
        "fc2_w": jax.random.normal(ks[6], (120, 84), jnp.float32) * 0.05,
        "fc2_b": jax.random.normal(ks[7], (84,), jnp.float32) * 0.05,
        "fc3_w": jax.random.normal(ks[8], (84, 10), jnp.float32) * 0.05,
        "fc3_b": jax.random.normal(ks[9], (10,), jnp.float32) * 0.05,
    }


if __name__ == "__main__":
    key = jax.random.PRNGKey(0)
    pkey, xkey = jax.random.split(key)
    params = _init_params(pkey)
    kparams = prepare_kernel_params(params)   # host-side, once

    # LeNet-5 input shape is fixed by the 400-dim classifier: (B, 1, 32, 32).
    x = jax.random.normal(xkey, (2, 1, 32, 32), jnp.float32)

    fwd = jax.jit(lenet5_forward)
    out = jax.block_until_ready(fwd(x, kparams))

    ref = _ref_forward(x, params)
    np.testing.assert_allclose(np.asarray(out), np.asarray(ref),
                               rtol=2e-3, atol=2e-3)
    assert out.shape == (2, 10)
    print("KERNEL_OK")
</pallas_src>

<mosaic_0001>
module attributes {stable_mosaic.version = 11 : i64} {
  func.func @_lenet5_kernel(%arg0: i32, %arg1: memref<1x32x32xf32, #tpu.memory_space<vmem>>, %arg2: memref<5x32x168xf32, #tpu.memory_space<vmem>>, %arg3: memref<1x168xf32, #tpu.memory_space<vmem>>, %arg4: memref<14x28xf32, #tpu.memory_space<vmem>>, %arg5: memref<168x84xf32, #tpu.memory_space<vmem>>, %arg6: memref<5x84x160xf32, #tpu.memory_space<vmem>>, %arg7: memref<1x160xf32, #tpu.memory_space<vmem>>, %arg8: memref<5x10xf32, #tpu.memory_space<vmem>>, %arg9: memref<160x80xf32, #tpu.memory_space<vmem>>, %arg10: memref<5x80x128xf32, #tpu.memory_space<vmem>>, %arg11: memref<1x128xf32, #tpu.memory_space<vmem>>, %arg12: memref<128x128xf32, #tpu.memory_space<vmem>>, %arg13: memref<1x128xf32, #tpu.memory_space<vmem>>, %arg14: memref<128x128xf32, #tpu.memory_space<vmem>>, %arg15: memref<1x128xf32, #tpu.memory_space<vmem>>, %arg16: memref<1x1x128xf32, #tpu.memory_space<vmem>>, %arg17: memref<14x84xf32, #tpu.memory_space<vmem>>, %arg18: memref<5x80xf32, #tpu.memory_space<vmem>>) attributes {dimension_semantics = [#tpu.dimension_semantics<parallel>], iteration_bounds = array<i64: 2>, scalar_prefetch = 0 : i64, scratch_operands = 2 : i64, tpu.core_type = #tpu.core_type<tc>, window_params = [{transform_indices = @transform_0, window_bounds = array<i64: 1, 32, 32>}, {pipeline_mode = #tpu.pipeline_mode<synchronous>, transform_indices = @transform_1, window_bounds = array<i64: 5, 32, 168>}, {pipeline_mode = #tpu.pipeline_mode<synchronous>, transform_indices = @transform_2, window_bounds = array<i64: 1, 168>}, {pipeline_mode = #tpu.pipeline_mode<synchronous>, transform_indices = @transform_3, window_bounds = array<i64: 14, 28>}, {pipeline_mode = #tpu.pipeline_mode<synchronous>, transform_indices = @transform_4, window_bounds = array<i64: 168, 84>}, {pipeline_mode = #tpu.pipeline_mode<synchronous>, transform_indices = @transform_5, window_bounds = array<i64: 5, 84, 160>}, {pipeline_mode = #tpu.pipeline_mode<synchronous>, transform_indices = @transform_6, window_bounds = array<i64: 1, 160>}, {pipeline_mode = #tpu.pipeline_mode<synchronous>, transform_indices = @transform_7, window_bounds = array<i64: 5, 10>}, {pipeline_mode = #tpu.pipeline_mode<synchronous>, transform_indices = @transform_8, window_bounds = array<i64: 160, 80>}, {pipeline_mode = #tpu.pipeline_mode<synchronous>, transform_indices = @transform_9, window_bounds = array<i64: 5, 80, 128>}, {pipeline_mode = #tpu.pipeline_mode<synchronous>, transform_indices = @transform_10, window_bounds = array<i64: 1, 128>}, {pipeline_mode = #tpu.pipeline_mode<synchronous>, transform_indices = @transform_11, window_bounds = array<i64: 128, 128>}, {pipeline_mode = #tpu.pipeline_mode<synchronous>, transform_indices = @transform_12, window_bounds = array<i64: 1, 128>}, {pipeline_mode = #tpu.pipeline_mode<synchronous>, transform_indices = @transform_13, window_bounds = array<i64: 128, 128>}, {pipeline_mode = #tpu.pipeline_mode<synchronous>, transform_indices = @transform_14, window_bounds = array<i64: 1, 128>}, {transform_indices = @transform_15, window_bounds = array<i64: 1, 1, 128>}]} {
    %c0 = arith.constant 0 : index
    %c0_0 = arith.constant 0 : index
    %0 = vector.load %arg3[%c0, %c0_0] : memref<1x168xf32, #tpu.memory_space<vmem>>, vector<1x168xf32>
    %c0_1 = arith.constant 0 : index
    %c0_2 = arith.constant 0 : index
    %c0_3 = arith.constant 0 : index
    %1 = vector.load %arg1[%c0_1, %c0_2, %c0_3] : memref<1x32x32xf32, #tpu.memory_space<vmem>>, vector<1x28x32xf32>
    %2 = vector.shape_cast %1 : vector<1x28x32xf32> to vector<28x32xf32>
    %c0_4 = arith.constant 0 : index
    %c0_5 = arith.constant 0 : index
    %c0_6 = arith.constant 0 : index
    %3 = vector.load %arg2[%c0_4, %c0_5, %c0_6] : memref<5x32x168xf32, #tpu.memory_space<vmem>>, vector<1x32x168xf32>
    %4 = vector.shape_cast %3 : vector<1x32x168xf32> to vector<32x168xf32>
    %cst = arith.constant dense<0.000000e+00> : vector<28x168xf32>
    %5 = tpu.matmul %2, %4, %cst {dimension_numbers = #tpu.dot_dimension_numbers<[1], [0], [0], [1], [0, 0, 1, 1], [], []>} : vector<28x32xf32>, vector<32x168xf32>, vector<28x168xf32> -> vector<28x168xf32>
    %6 = vector.broadcast %0 : vector<1x168xf32> to vector<28x168xf32>
    %7 = arith.addf %6, %5 : vector<28x168xf32>
    %c0_7 = arith.constant 0 : index
    %c1 = arith.constant 1 : index
    %c0_8 = arith.constant 0 : index
    %8 = vector.load %arg1[%c0_7, %c1, %c0_8] : memref<1x32x32xf32, #tpu.memory_space<vmem>>, vector<1x28x32xf32>
    %9 = vector.shape_cast %8 : vector<1x28x32xf32> to vector<28x32xf32>
    %c1_9 = arith.constant 1 : index
    %c0_10 = arith.constant 0 : index
    %c0_11 = arith.constant 0 : index
    %10 = vector.load %arg2[%c1_9, %c0_10, %c0_11] : memref<5x32x168xf32, #tpu.memory_space<vmem>>, vector<1x32x168xf32>
    %11 = vector.shape_cast %10 : vector<1x32x168xf32> to vector<32x168xf32>
    %cst_12 = arith.constant dense<0.000000e+00> : vector<28x168xf32>
    %12 = tpu.matmul %9, %11, %cst_12 {dimension_numbers = #tpu.dot_dimension_numbers<[1], [0], [0], [1], [0, 0, 1, 1], [], []>} : vector<28x32xf32>, vector<32x168xf32>, vector<28x168xf32> -> vector<28x168xf32>
    %13 = arith.addf %7, %12 : vector<28x168xf32>
    %c0_13 = arith.constant 0 : index
    %c2 = arith.constant 2 : index
    %c0_14 = arith.constant 0 : index
    %14 = vector.load %arg1[%c0_13, %c2, %c0_14] : memref<1x32x32xf32, #tpu.memory_space<vmem>>, vector<1x28x32xf32>
    %15 = vector.shape_cast %14 : vector<1x28x32xf32> to vector<28x32xf32>
    %c2_15 = arith.constant 2 : index
    %c0_16 = arith.constant 0 : index
    %c0_17 = arith.constant 0 : index
    %16 = vector.load %arg2[%c2_15, %c0_16, %c0_17] : memref<5x32x168xf32, #tpu.memory_space<vmem>>, vector<1x32x168xf32>
    %17 = vector.shape_cast %16 : vector<1x32x168xf32> to vector<32x168xf32>
    %cst_18 = arith.constant dense<0.000000e+00> : vector<28x168xf32>
    %18 = tpu.matmul %15, %17, %cst_18 {dimension_numbers = #tpu.dot_dimension_numbers<[1], [0], [0], [1], [0, 0, 1, 1], [], []>} : vector<28x32xf32>, vector<32x168xf32>, vector<28x168xf32> -> vector<28x168xf32>
    %19 = arith.addf %13, %18 : vector<28x168xf32>
    %c0_19 = arith.constant 0 : index
    %c3 = arith.constant 3 : index
    %c0_20 = arith.constant 0 : index
    %20 = vector.load %arg1[%c0_19, %c3, %c0_20] : memref<1x32x32xf32, #tpu.memory_space<vmem>>, vector<1x28x32xf32>
    %21 = vector.shape_cast %20 : vector<1x28x32xf32> to vector<28x32xf32>
    %c3_21 = arith.constant 3 : index
    %c0_22 = arith.constant 0 : index
    %c0_23 = arith.constant 0 : index
    %22 = vector.load %arg2[%c3_21, %c0_22, %c0_23] : memref<5x32x168xf32, #tpu.memory_space<vmem>>, vector<1x32x168xf32>
    %23 = vector.shape_cast %22 : vector<1x32x168xf32> to vector<32x168xf32>
    %cst_24 = arith.constant dense<0.000000e+00> : vector<28x168xf32>
    %24 = tpu.matmul %21, %23, %cst_24 {dimension_numbers = #tpu.dot_dimension_numbers<[1], [0], [0], [1], [0, 0, 1, 1], [], []>} : vector<28x32xf32>, vector<32x168xf32>, vector<28x168xf32> -> vector<28x168xf32>
    %25 = arith.addf %19, %24 : vector<28x168xf32>
    %c0_25 = arith.constant 0 : index
    %c4 = arith.constant 4 : index
    %c0_26 = arith.constant 0 : index
    %26 = vector.load %arg1[%c0_25, %c4, %c0_26] : memref<1x32x32xf32, #tpu.memory_space<vmem>>, vector<1x28x32xf32>
    %27 = vector.shape_cast %26 : vector<1x28x32xf32> to vector<28x32xf32>
    %c4_27 = arith.constant 4 : index
    %c0_28 = arith.constant 0 : index
    %c0_29 = arith.constant 0 : index
    %28 = vector.load %arg2[%c4_27, %c0_28, %c0_29] : memref<5x32x168xf32, #tpu.memory_space<vmem>>, vector<1x32x168xf32>
    %29 = vector.shape_cast %28 : vector<1x32x168xf32> to vector<32x168xf32>
    %cst_30 = arith.constant dense<0.000000e+00> : vector<28x168xf32>
    %30 = tpu.matmul %27, %29, %cst_30 {dimension_numbers = #tpu.dot_dimension_numbers<[1], [0], [0], [1], [0, 0, 1, 1], [], []>} : vector<28x32xf32>, vector<32x168xf32>, vector<28x168xf32> -> vector<28x168xf32>
    %31 = arith.addf %25, %30 : vector<28x168xf32>
    %32 = arith.mulf %31, %31 : vector<28x168xf32>
    %33 = arith.addf %32, %31 : vector<28x168xf32>
    %c0_31 = arith.constant 0 : index
    %c0_32 = arith.constant 0 : index
    %34 = vector.load %arg4[%c0_31, %c0_32] : memref<14x28xf32, #tpu.memory_space<vmem>>, vector<14x28xf32>
    %cst_33 = arith.constant dense<0.000000e+00> : vector<14x168xf32>
    %35 = tpu.matmul %34, %33, %cst_33 {dimension_numbers = #tpu.dot_dimension_numbers<[1], [0], [0], [1], [0, 0, 1, 1], [], []>} : vector<14x28xf32>, vector<28x168xf32>, vector<14x168xf32> -> vector<14x168xf32>
    %c0_34 = arith.constant 0 : index
    %c0_35 = arith.constant 0 : index
    %36 = vector.load %arg5[%c0_34, %c0_35] : memref<168x84xf32, #tpu.memory_space<vmem>>, vector<168x84xf32>
    %cst_36 = arith.constant dense<0.000000e+00> : vector<14x84xf32>
    %37 = tpu.matmul %35, %36, %cst_36 {dimension_numbers = #tpu.dot_dimension_numbers<[1], [0], [0], [1], [0, 0, 1, 1], [], []>} : vector<14x168xf32>, vector<168x84xf32>, vector<14x84xf32> -> vector<14x84xf32>
    %cst_37 = arith.constant 2.500000e-01 : f32
    %38 = vector.broadcast %cst_37 : f32 to vector<14x84xf32>
    %39 = arith.mulf %38, %37 : vector<14x84xf32>
    %c0_38 = arith.constant 0 : index
    %c0_39 = arith.constant 0 : index
    %40 = vector.load %arg17[%c0_38, %c0_39] : memref<14x84xf32, #tpu.memory_space<vmem>>, vector<14x84xf32>
    tpu.vector_store %arg17[%c0_38, %c0_39], %39 {strides = array<i32>} : memref<14x84xf32, #tpu.memory_space<vmem>>, vector<14x84xf32>,
    %c0_40 = arith.constant 0 : index
    %c0_41 = arith.constant 0 : index
    %41 = vector.load %arg7[%c0_40, %c0_41] : memref<1x160xf32, #tpu.memory_space<vmem>>, vector<1x160xf32>
    %c0_42 = arith.constant 0 : index
    %c0_43 = arith.constant 0 : index
    %42 = vector.load %arg17[%c0_42, %c0_43] : memref<14x84xf32, #tpu.memory_space<vmem>>, vector<10x84xf32>
    %c0_44 = arith.constant 0 : index
    %c0_45 = arith.constant 0 : index
    %c0_46 = arith.constant 0 : index
    %43 = vector.load %arg6[%c0_44, %c0_45, %c0_46] : memref<5x84x160xf32, #tpu.memory_space<vmem>>, vector<1x84x160xf32>
    %44 = vector.shape_cast %43 : vector<1x84x160xf32> to vector<84x160xf32>
    %cst_47 = arith.constant dense<0.000000e+00> : vector<10x160xf32>
    %45 = tpu.matmul %42, %44, %cst_47 {dimension_numbers = #tpu.dot_dimension_numbers<[1], [0], [0], [1], [0, 0, 1, 1], [], []>} : vector<10x84xf32>, vector<84x160xf32>, vector<10x160xf32> -> vector<10x160xf32>
    %46 = vector.broadcast %41 : vector<1x160xf32> to vector<10x160xf32>
    %47 = arith.addf %46, %45 : vector<10x160xf32>
    %c1_48 = arith.constant 1 : index
    %c0_49 = arith.constant 0 : index
    %48 = vector.load %arg17[%c1_48, %c0_49] : memref<14x84xf32, #tpu.memory_space<vmem>>, vector<10x84xf32>
    %c1_50 = arith.constant 1 : index
    %c0_51 = arith.constant 0 : index
    %c0_52 = arith.constant 0 : index
    %49 = vector.load %arg6[%c1_50, %c0_51, %c0_52] : memref<5x84x160xf32, #tpu.memory_space<vmem>>, vector<1x84x160xf32>
    %50 = vector.shape_cast %49 : vector<1x84x160xf32> to vector<84x160xf32>
    %cst_53 = arith.constant dense<0.000000e+00> : vector<10x160xf32>
    %51 = tpu.matmul %48, %50, %cst_53 {dimension_numbers = #tpu.dot_dimension_numbers<[1], [0], [0], [1], [0, 0, 1, 1], [], []>} : vector<10x84xf32>, vector<84x160xf32>, vector<10x160xf32> -> vector<10x160xf32>
    %52 = arith.addf %47, %51 : vector<10x160xf32>
    %c2_54 = arith.constant 2 : index
    %c0_55 = arith.constant 0 : index
    %53 = vector.load %arg17[%c2_54, %c0_55] : memref<14x84xf32, #tpu.memory_space<vmem>>, vector<10x84xf32>
    %c2_56 = arith.constant 2 : index
    %c0_57 = arith.constant 0 : index
    %c0_58 = arith.constant 0 : index
    %54 = vector.load %arg6[%c2_56, %c0_57, %c0_58] : memref<5x84x160xf32, #tpu.memory_space<vmem>>, vector<1x84x160xf32>
    %55 = vector.shape_cast %54 : vector<1x84x160xf32> to vector<84x160xf32>
    %cst_59 = arith.constant dense<0.000000e+00> : vector<10x160xf32>
    %56 = tpu.matmul %53, %55, %cst_59 {dimension_numbers = #tpu.dot_dimension_numbers<[1], [0], [0], [1], [0, 0, 1, 1], [], []>} : vector<10x84xf32>, vector<84x160xf32>, vector<10x160xf32> -> vector<10x160xf32>
    %57 = arith.addf %52, %56 : vector<10x160xf32>
    %c3_60 = arith.constant 3 : index
    %c0_61 = arith.constant 0 : index
    %58 = vector.load %arg17[%c3_60, %c0_61] : memref<14x84xf32, #tpu.memory_space<vmem>>, vector<10x84xf32>
    %c3_62 = arith.constant 3 : index
    %c0_63 = arith.constant 0 : index
    %c0_64 = arith.constant 0 : index
    %59 = vector.load %arg6[%c3_62, %c0_63, %c0_64] : memref<5x84x160xf32, #tpu.memory_space<vmem>>, vector<1x84x160xf32>
    %60 = vector.shape_cast %59 : vector<1x84x160xf32> to vector<84x160xf32>
    %cst_65 = arith.constant dense<0.000000e+00> : vector<10x160xf32>
    %61 = tpu.matmul %58, %60, %cst_65 {dimension_numbers = #tpu.dot_dimension_numbers<[1], [0], [0], [1], [0, 0, 1, 1], [], []>} : vector<10x84xf32>, vector<84x160xf32>, vector<10x160xf32> -> vector<10x160xf32>
    %62 = arith.addf %57, %61 : vector<10x160xf32>
    %c4_66 = arith.constant 4 : index
    %c0_67 = arith.constant 0 : index
    %63 = vector.load %arg17[%c4_66, %c0_67] : memref<14x84xf32, #tpu.memory_space<vmem>>, vector<10x84xf32>
    %c4_68 = arith.constant 4 : index
    %c0_69 = arith.constant 0 : index
    %c0_70 = arith.constant 0 : index
    %64 = vector.load %arg6[%c4_68, %c0_69, %c0_70] : memref<5x84x160xf32, #tpu.memory_space<vmem>>, vector<1x84x160xf32>
    %65 = vector.shape_cast %64 : vector<1x84x160xf32> to vector<84x160xf32>
    %cst_71 = arith.constant dense<0.000000e+00> : vector<10x160xf32>
    %66 = tpu.matmul %63, %65, %cst_71 {dimension_numbers = #tpu.dot_dimension_numbers<[1], [0], [0], [1], [0, 0, 1, 1], [], []>} : vector<10x84xf32>, vector<84x160xf32>, vector<10x160xf32> -> vector<10x160xf32>
    %67 = arith.addf %62, %66 : vector<10x160xf32>
    %68 = arith.mulf %67, %67 : vector<10x160xf32>
    %69 = arith.addf %68, %67 : vector<10x160xf32>
    %c0_72 = arith.constant 0 : index
    %c0_73 = arith.constant 0 : index
    %70 = vector.load %arg8[%c0_72, %c0_73] : memref<5x10xf32, #tpu.memory_space<vmem>>, vector<5x10xf32>
    %cst_74 = arith.constant dense<0.000000e+00> : vector<5x160xf32>
    %71 = tpu.matmul %70, %69, %cst_74 {dimension_numbers = #tpu.dot_dimension_numbers<[1], [0], [0], [1], [0, 0, 1, 1], [], []>} : vector<5x10xf32>, vector<10x160xf32>, vector<5x160xf32> -> vector<5x160xf32>
    %c0_75 = arith.constant 0 : index
    %c0_76 = arith.constant 0 : index
    %72 = vector.load %arg9[%c0_75, %c0_76] : memref<160x80xf32, #tpu.memory_space<vmem>>, vector<160x80xf32>
    %cst_77 = arith.constant dense<0.000000e+00> : vector<5x80xf32>
    %73 = tpu.matmul %71, %72, %cst_77 {dimension_numbers = #tpu.dot_dimension_numbers<[1], [0], [0], [1], [0, 0, 1, 1], [], []>} : vector<5x160xf32>, vector<160x80xf32>, vector<5x80xf32> -> vector<5x80xf32>
    %cst_78 = arith.constant 2.500000e-01 : f32
    %74 = vector.broadcast %cst_78 : f32 to vector<5x80xf32>
    %75 = arith.mulf %74, %73 : vector<5x80xf32>
    %c0_79 = arith.constant 0 : index
    %c0_80 = arith.constant 0 : index
    %76 = vector.load %arg18[%c0_79, %c0_80] : memref<5x80xf32, #tpu.memory_space<vmem>>, vector<5x80xf32>
    tpu.vector_store %arg18[%c0_79, %c0_80], %75 {strides = array<i32>} : memref<5x80xf32, #tpu.memory_space<vmem>>, vector<5x80xf32>,
    %c0_81 = arith.constant 0 : index
    %c0_82 = arith.constant 0 : index
    %77 = vector.load %arg11[%c0_81, %c0_82] : memref<1x128xf32, #tpu.memory_space<vmem>>, vector<1x128xf32>
    %c0_83 = arith.constant 0 : index
    %c0_84 = arith.constant 0 : index
    %78 = vector.load %arg18[%c0_83, %c0_84] : memref<5x80xf32, #tpu.memory_space<vmem>>, vector<1x80xf32>
    %c0_85 = arith.constant 0 : index
    %c0_86 = arith.constant 0 : index
    %c0_87 = arith.constant 0 : index
    %79 = vector.load %arg10[%c0_85, %c0_86, %c0_87] : memref<5x80x128xf32, #tpu.memory_space<vmem>>, vector<1x80x128xf32>
    %80 = vector.shape_cast %79 : vector<1x80x128xf32> to vector<80x128xf32>
    %cst_88 = arith.constant dense<0.000000e+00> : vector<1x128xf32>
    %81 = tpu.matmul %78, %80, %cst_88 {dimension_numbers = #tpu.dot_dimension_numbers<[1], [0], [0], [1], [0, 0, 1, 1], [], []>} : vector<1x80xf32>, vector<80x128xf32>, vector<1x128xf32> -> vector<1x128xf32>
    %82 = arith.addf %77, %81 : vector<1x128xf32>
    %c1_89 = arith.constant 1 : index
    %c0_90 = arith.constant 0 : index
    %83 = vector.load %arg18[%c1_89, %c0_90] : memref<5x80xf32, #tpu.memory_space<vmem>>, vector<1x80xf32>
    %c1_91 = arith.constant 1 : index
    %c0_92 = arith.constant 0 : index
    %c0_93 = arith.constant 0 : index
    %84 = vector.load %arg10[%c1_91, %c0_92, %c0_93] : memref<5x80x128xf32, #tpu.memory_space<vmem>>, vector<1x80x128xf32>
    %85 = vector.shape_cast %84 : vector<1x80x128xf32> to vector<80x128xf32>
    %cst_94 = arith.constant dense<0.000000e+00> : vector<1x128xf32>
    %86 = tpu.matmul %83, %85, %cst_94 {dimension_numbers = #tpu.dot_dimension_numbers<[1], [0], [0], [1], [0, 0, 1, 1], [], []>} : vector<1x80xf32>, vector<80x128xf32>, vector<1x128xf32> -> vector<1x128xf32>
    %87 = arith.addf %82, %86 : vector<1x128xf32>
    %c2_95 = arith.constant 2 : index
    %c0_96 = arith.constant 0 : index
    %88 = vector.load %arg18[%c2_95, %c0_96] : memref<5x80xf32, #tpu.memory_space<vmem>>, vector<1x80xf32>
    %c2_97 = arith.constant 2 : index
    %c0_98 = arith.constant 0 : index
    %c0_99 = arith.constant 0 : index
    %89 = vector.load %arg10[%c2_97, %c0_98, %c0_99] : memref<5x80x128xf32, #tpu.memory_space<vmem>>, vector<1x80x128xf32>
    %90 = vector.shape_cast %89 : vector<1x80x128xf32> to vector<80x128xf32>
    %cst_100 = arith.constant dense<0.000000e+00> : vector<1x128xf32>
    %91 = tpu.matmul %88, %90, %cst_100 {dimension_numbers = #tpu.dot_dimension_numbers<[1], [0], [0], [1], [0, 0, 1, 1], [], []>} : vector<1x80xf32>, vector<80x128xf32>, vector<1x128xf32> -> vector<1x128xf32>
    %92 = arith.addf %87, %91 : vector<1x128xf32>
    %c3_101 = arith.constant 3 : index
    %c0_102 = arith.constant 0 : index
    %93 = vector.load %arg18[%c3_101, %c0_102] : memref<5x80xf32, #tpu.memory_space<vmem>>, vector<1x80xf32>
    %c3_103 = arith.constant 3 : index
    %c0_104 = arith.constant 0 : index
    %c0_105 = arith.constant 0 : index
    %94 = vector.load %arg10[%c3_103, %c0_104, %c0_105] : memref<5x80x128xf32, #tpu.memory_space<vmem>>, vector<1x80x128xf32>
    %95 = vector.shape_cast %94 : vector<1x80x128xf32> to vector<80x128xf32>
    %cst_106 = arith.constant dense<0.000000e+00> : vector<1x128xf32>
    %96 = tpu.matmul %93, %95, %cst_106 {dimension_numbers = #tpu.dot_dimension_numbers<[1], [0], [0], [1], [0, 0, 1, 1], [], []>} : vector<1x80xf32>, vector<80x128xf32>, vector<1x128xf32> -> vector<1x128xf32>
    %97 = arith.addf %92, %96 : vector<1x128xf32>
    %c4_107 = arith.constant 4 : index
    %c0_108 = arith.constant 0 : index
    %98 = vector.load %arg18[%c4_107, %c0_108] : memref<5x80xf32, #tpu.memory_space<vmem>>, vector<1x80xf32>
    %c4_109 = arith.constant 4 : index
    %c0_110 = arith.constant 0 : index
    %c0_111 = arith.constant 0 : index
    %99 = vector.load %arg10[%c4_109, %c0_110, %c0_111] : memref<5x80x128xf32, #tpu.memory_space<vmem>>, vector<1x80x128xf32>
    %100 = vector.shape_cast %99 : vector<1x80x128xf32> to vector<80x128xf32>
    %cst_112 = arith.constant dense<0.000000e+00> : vector<1x128xf32>
    %101 = tpu.matmul %98, %100, %cst_112 {dimension_numbers = #tpu.dot_dimension_numbers<[1], [0], [0], [1], [0, 0, 1, 1], [], []>} : vector<1x80xf32>, vector<80x128xf32>, vector<1x128xf32> -> vector<1x128xf32>
    %102 = arith.addf %97, %101 : vector<1x128xf32>
    %c0_113 = arith.constant 0 : index
    %c0_114 = arith.constant 0 : index
    %103 = vector.load %arg12[%c0_113, %c0_114] : memref<128x128xf32, #tpu.memory_space<vmem>>, vector<128x128xf32>
    %cst_115 = arith.constant dense<0.000000e+00> : vector<1x128xf32>
    %104 = tpu.matmul %102, %103, %cst_115 {dimension_numbers = #tpu.dot_dimension_numbers<[1], [0], [0], [1], [0, 0, 1, 1], [], []>} : vector<1x128xf32>, vector<128x128xf32>, vector<1x128xf32> -> vector<1x128xf32>
    %c0_116 = arith.constant 0 : index
    %c0_117 = arith.constant 0 : index
    %105 = vector.load %arg13[%c0_116, %c0_117] : memref<1x128xf32, #tpu.memory_space<vmem>>, vector<1x128xf32>
    %106 = arith.addf %104, %105 : vector<1x128xf32>
    %c0_118 = arith.constant 0 : index
    %c0_119 = arith.constant 0 : index
    %107 = vector.load %arg14[%c0_118, %c0_119] : memref<128x128xf32, #tpu.memory_space<vmem>>, vector<128x128xf32>
    %cst_120 = arith.constant dense<0.000000e+00> : vector<1x128xf32>
    %108 = tpu.matmul %106, %107, %cst_120 {dimension_numbers = #tpu.dot_dimension_numbers<[1], [0], [0], [1], [0, 0, 1, 1], [], []>} : vector<1x128xf32>, vector<128x128xf32>, vector<1x128xf32> -> vector<1x128xf32>
    %c0_121 = arith.constant 0 : index
    %c0_122 = arith.constant 0 : index
    %109 = vector.load %arg15[%c0_121, %c0_122] : memref<1x128xf32, #tpu.memory_space<vmem>>, vector<1x128xf32>
    %110 = arith.addf %108, %109 : vector<1x128xf32>
    %c0_123 = arith.constant 0 : index
    %c0_124 = arith.constant 0 : index
    %c0_125 = arith.constant 0 : index
    %111 = vector.load %arg16[%c0_123, %c0_124, %c0_125] : memref<1x1x128xf32, #tpu.memory_space<vmem>>, vector<1x1x128xf32>
    %112 = vector.shape_cast %111 : vector<1x1x128xf32> to vector<1x128xf32>
    %113 = vector.shape_cast %110 : vector<1x128xf32> to vector<1x1x128xf32>
    tpu.vector_store %arg16[%c0_123, %c0_124, %c0_125], %113 {strides = array<i32>} : memref<1x1x128xf32, #tpu.memory_space<vmem>>, vector<1x1x128xf32>,
    return
  }
  func.func @transform_0(%arg0: i32) -> (i32, i32, i32) {
    %c0_i32 = arith.constant 0 : i32
    %c0_i32_0 = arith.constant 0 : i32
    %c0_i32_1 = arith.constant 0 : i32
    return %arg0, %c0_i32, %c0_i32_0 : i32, i32, i32
  }
  func.func @transform_1(%arg0: i32) -> (i32, i32, i32) {
    %c0_i32 = arith.constant 0 : i32
    %c0_i32_0 = arith.constant 0 : i32
    %c0_i32_1 = arith.constant 0 : i32
    %c0_i32_2 = arith.constant 0 : i32
    return %c0_i32, %c0_i32_0, %c0_i32_1 : i32, i32, i32
  }
  func.func @transform_2(%arg0: i32) -> (i32, i32) {
    %c0_i32 = arith.constant 0 : i32
    %c0_i32_0 = arith.constant 0 : i32
    %c0_i32_1 = arith.constant 0 : i32
    return %c0_i32, %c0_i32_0 : i32, i32
  }
  func.func @transform_3(%arg0: i32) -> (i32, i32) {
    %c0_i32 = arith.constant 0 : i32
    %c0_i32_0 = arith.constant 0 : i32
    %c0_i32_1 = arith.constant 0 : i32
    return %c0_i32, %c0_i32_0 : i32, i32
  }
  func.func @transform_4(%arg0: i32) -> (i32, i32) {
    %c0_i32 = arith.constant 0 : i32
    %c0_i32_0 = arith.constant 0 : i32
    %c0_i32_1 = arith.constant 0 : i32
    return %c0_i32, %c0_i32_0 : i32, i32
  }
  func.func @transform_5(%arg0: i32) -> (i32, i32, i32) {
    %c0_i32 = arith.constant 0 : i32
    %c0_i32_0 = arith.constant 0 : i32
    %c0_i32_1 = arith.constant 0 : i32
    %c0_i32_2 = arith.constant 0 : i32
    return %c0_i32, %c0_i32_0, %c0_i32_1 : i32, i32, i32
  }
  func.func @transform_6(%arg0: i32) -> (i32, i32) {
    %c0_i32 = arith.constant 0 : i32
    %c0_i32_0 = arith.constant 0 : i32
    %c0_i32_1 = arith.constant 0 : i32
    return %c0_i32, %c0_i32_0 : i32, i32
  }
  func.func @transform_7(%arg0: i32) -> (i32, i32) {
    %c0_i32 = arith.constant 0 : i32
    %c0_i32_0 = arith.constant 0 : i32
    %c0_i32_1 = arith.constant 0 : i32
    return %c0_i32, %c0_i32_0 : i32, i32
  }
  func.func @transform_8(%arg0: i32) -> (i32, i32) {
    %c0_i32 = arith.constant 0 : i32
    %c0_i32_0 = arith.constant 0 : i32
    %c0_i32_1 = arith.constant 0 : i32
    return %c0_i32, %c0_i32_0 : i32, i32
  }
  func.func @transform_9(%arg0: i32) -> (i32, i32, i32) {
    %c0_i32 = arith.constant 0 : i32
    %c0_i32_0 = arith.constant 0 : i32
    %c0_i32_1 = arith.constant 0 : i32
    %c0_i32_2 = arith.constant 0 : i32
    return %c0_i32, %c0_i32_0, %c0_i32_1 : i32, i32, i32
  }
  func.func @transform_10(%arg0: i32) -> (i32, i32) {
    %c0_i32 = arith.constant 0 : i32
    %c0_i32_0 = arith.constant 0 : i32
    %c0_i32_1 = arith.constant 0 : i32
    return %c0_i32, %c0_i32_0 : i32, i32
  }
  func.func @transform_11(%arg0: i32) -> (i32, i32) {
    %c0_i32 = arith.constant 0 : i32
    %c0_i32_0 = arith.constant 0 : i32
    %c0_i32_1 = arith.constant 0 : i32
    return %c0_i32, %c0_i32_0 : i32, i32
  }
  func.func @transform_12(%arg0: i32) -> (i32, i32) {
    %c0_i32 = arith.constant 0 : i32
    %c0_i32_0 = arith.constant 0 : i32
    %c0_i32_1 = arith.constant 0 : i32
    return %c0_i32, %c0_i32_0 : i32, i32
  }
  func.func @transform_13(%arg0: i32) -> (i32, i32) {
    %c0_i32 = arith.constant 0 : i32
    %c0_i32_0 = arith.constant 0 : i32
    %c0_i32_1 = arith.constant 0 : i32
    return %c0_i32, %c0_i32_0 : i32, i32
  }
  func.func @transform_14(%arg0: i32) -> (i32, i32) {
    %c0_i32 = arith.constant 0 : i32
    %c0_i32_0 = arith.constant 0 : i32
    %c0_i32_1 = arith.constant 0 : i32
    return %c0_i32, %c0_i32_0 : i32, i32
  }
  func.func @transform_15(%arg0: i32) -> (i32, i32, i32) {
    %c0_i32 = arith.constant 0 : i32
    %c0_i32_0 = arith.constant 0 : i32
    %c0_i32_1 = arith.constant 0 : i32
    return %arg0, %c0_i32, %c0_i32_0 : i32, i32, i32
  }
}

</mosaic_0001>

<llo_original>
// kernel: lenet5_forward.1
$region0: #{lenet5_forward.1}
  #allocation0 [shape = 'u32[]', space=smem, size = 0x4, offset = 0x4, fixed_abs, tag = 'smem constant byte address 0x4 - core index']
  #allocation1 [shape = 'u32[72,128]{1,0:T(1,128)}', space=vmem, size = 0x9000, scoped, tag = 'internal scratch']
  #allocation2 [shape = 'f32[14,84]{1,0:T(8,128)}', space=vmem, size = 0x2000, scoped, tag = 'scratch operand']
  #allocation3 [shape = 'f32[5,80]{1,0:T(8,128)}', space=vmem, size = 0x1000, scoped, tag = 'scratch operand']
  %s0 = inlined_call_operand.vmem [shape: f32[2,32,32], index: 0, kind: input, shape index: {}]
  %s1 = inlined_call_operand.vmem [shape: f32[5,32,168], index: 1, kind: input, shape index: {}]
  %s2 = inlined_call_operand.vmem [shape: f32[1,168], index: 2, kind: input, shape index: {}]
  %s3 = inlined_call_operand.vmem [shape: f32[14,28], index: 3, kind: input, shape index: {}]
  %s4 = inlined_call_operand.vmem [shape: f32[168,84], index: 4, kind: input, shape index: {}]
  %s5 = inlined_call_operand.vmem [shape: f32[5,84,160], index: 5, kind: input, shape index: {}]
  %s6 = inlined_call_operand.vmem [shape: f32[1,160], index: 6, kind: input, shape index: {}]
  %s7 = inlined_call_operand.vmem [shape: f32[5,10], index: 7, kind: input, shape index: {}]
  %s8 = inlined_call_operand.vmem [shape: f32[160,80], index: 8, kind: input, shape index: {}]
  %s9 = inlined_call_operand.vmem [shape: f32[5,80,128], index: 9, kind: input, shape index: {}]
  %s10 = inlined_call_operand.vmem [shape: f32[1,128], index: 10, kind: input, shape index: {}]
  %s11 = inlined_call_operand.vmem [shape: f32[128,128], index: 11, kind: input, shape index: {}]
  %s12 = inlined_call_operand.vmem [shape: f32[1,128], index: 12, kind: input, shape index: {}]
  %s13 = inlined_call_operand.vmem [shape: f32[128,128], index: 13, kind: input, shape index: {}]
  %s14 = inlined_call_operand.vmem [shape: f32[1,128], index: 14, kind: input, shape index: {}]
  %s15 = inlined_call_operand.hbm [shape: f32[2,1,128], index: 15, kind: output, shape index: {}]
  %s16 = sld [smem:[#allocation0]]
  $region93: #{lenet5_forward.1} parent=0
    _
  %s18 = ssub.s32 1, %s16
  %s19 = scalar_select 0, %s18, %s16
  $region1: #{lenet5_forward.1} parent=0
    #allocation4 [shape = 'u8[1024]{0}', space=vmem, size = 0x400, scoped, tag = 'output window, operand 0']
    #allocation5 [shape = 's32[2]{0}', space=sflag, size = 0x8, scoped, tag = 'scoped memory for lenet5_forward.1']
    %20 = vsyncpa [#allocation5], 0
    %s21 = scalar_lea.sflag [#allocation5], 1
    %22 = vsyncpa %s21, 0
    loop: start=0, step=1, limit=4
    $region2: #{lenet5_forward.1} parent=1 // loop_pre_header
      _
    $region3: #{lenet5_forward.1} parent=1 // loop_header
      %s24 = sphi 0, %s28
      %p25 = scmp.ge.s32.totalorder %s24, 4
      %s34 = sphi 0, %s36
      %s37 = sphi 0, %s34
      %s38 = sphi 0, %s37
      %s54 = sphi 0, %s38
      %s58 = sphi 0, %s58
      %s60 = sphi 0, %s58
      %s61 = sphi 0, %s60
      %s75 = sphi 0, %s61
      %s79 = sphi 0, %s79
      %s81 = sphi 0, %s79
      %s82 = sphi 0, %s81
      %s96 = sphi 0, %s82
      %s100 = sphi 0, %s100
      %s102 = sphi 0, %s100
      %s103 = sphi 0, %s102
      %s117 = sphi 0, %s103
      %s121 = sphi 0, %s121
      %s123 = sphi 0, %s121
      %s124 = sphi 0, %s123
      %s138 = sphi 0, %s124
      %s142 = sphi 0, %s142
      %s144 = sphi 0, %s142
      %s145 = sphi 0, %s144
      %s159 = sphi 0, %s145
      %s163 = sphi 0, %s163
      %s165 = sphi 0, %s163
      %s166 = sphi 0, %s165
      %s180 = sphi 0, %s166
      %s184 = sphi 0, %s184
      %s186 = sphi 0, %s184
      %s187 = sphi 0, %s186
      %s201 = sphi 0, %s187
      %s205 = sphi 0, %s205
      %s207 = sphi 0, %s205
      %s208 = sphi 0, %s207
      %s222 = sphi 0, %s208
      %s226 = sphi 0, %s226
      %s228 = sphi 0, %s226
      %s229 = sphi 0, %s228
      %s243 = sphi 0, %s229
      %s247 = sphi 0, %s247
      %s249 = sphi 0, %s247
      %s250 = sphi 0, %s249
      %s264 = sphi 0, %s250
      %s268 = sphi 0, %s268
      %s270 = sphi 0, %s268
      %s271 = sphi 0, %s270
      %s285 = sphi 0, %s271
      %s289 = sphi 0, %s289
      %s291 = sphi 0, %s289
      %s292 = sphi 0, %s291
      %s306 = sphi 0, %s292
      %s310 = sphi 0, %s310
      %s312 = sphi 0, %s310
      %s313 = sphi 0, %s312
      %s327 = sphi 0, %s313
      %s331 = sphi 0, %s331
      %s333 = sphi 0, %s331
      %s334 = sphi 0, %s333
      %s348 = sphi 0, %s334
      %s354 = sphi 0, %s356
      %s357 = sphi 0, %s354
      %s358 = sphi 0, %s357
      %s374 = sphi 0, %s358
    $region4: #{lenet5_forward.1} parent=1 // loop_header_branch
      %27 = sbr.rel (%p25) target = $region8
    $region5: #{lenet5_forward.1} parent=1 // loop_body
      %s29 = ssub.s32 %s24, 1
      %s30 = ssub.s32 %s24, 2
      %s31 = sadd.s32 %s24, 1
      %s32 = ssub.s32 %s24, %s31
      %p33 = scmp.eq.s32.totalorder %s32, 0
      %s35 = sadd.s32 %s34, 1
      %s36 = scalar_select %p33, %s34, %s35
      %p39 = pneg %p33
      %p40 = scmp.eq.s32.totalorder %s24, 1
      %p41 = por %p39, %p40
      %p42 = scmp.ne.s32.totalorder %s34, %s37
      %p43 = scmp.eq.s32.totalorder %s24, 0
      %p44 = por %p42, %p43
      %p45 = scmp.ne.s32.totalorder %s34, %s37
      %p46 = scmp.eq.s32.totalorder %s29, 1
      %p47 = por %p45, %p46
      %p48 = scmp.ne.s32.totalorder %s37, %s38
      %p49 = scmp.eq.s32.totalorder %s29, 0
      %p50 = por %p48, %p49
      %p51 = scmp.ne.s32.totalorder %s37, %s38
      %p52 = scmp.eq.s32.totalorder %s30, 1
      %p53 = por %p51, %p52
      %p55 = scmp.ne.s32.totalorder %s38, %s54
      %p56 = scmp.eq.s32.totalorder %s30, 0
      %p57 = por %p55, %p56
      %s59 = sadd.s32 %s58, 1
      %p62 = scmp.eq.s32.totalorder %s24, 1
      %p63 = scmp.ne.s32.totalorder %s58, %s60
      %p64 = scmp.eq.s32.totalorder %s24, 0
      %p65 = por %p63, %p64
      %p66 = scmp.ne.s32.totalorder %s58, %s60
      %p67 = scmp.eq.s32.totalorder %s29, 1
      %p68 = por %p66, %p67
      %p69 = scmp.ne.s32.totalorder %s60, %s61
      %p70 = scmp.eq.s32.totalorder %s29, 0
      %p71 = por %p69, %p70
      %p72 = scmp.ne.s32.totalorder %s60, %s61
      %p73 = scmp.eq.s32.totalorder %s30, 1
      %p74 = por %p72, %p73
      %p76 = scmp.ne.s32.totalorder %s61, %s75
      %p77 = scmp.eq.s32.totalorder %s30, 0
      %p78 = por %p76, %p77
      %s80 = sadd.s32 %s79, 1
      %p83 = scmp.eq.s32.totalorder %s24, 1
      %p84 = scmp.ne.s32.totalorder %s79, %s81
      %p85 = scmp.eq.s32.totalorder %s24, 0
      %p86 = por %p84, %p85
      %p87 = scmp.ne.s32.totalorder %s79, %s81
      %p88 = scmp.eq.s32.totalorder %s29, 1
      %p89 = por %p87, %p88
      %p90 = scmp.ne.s32.totalorder %s81, %s82
      %p91 = scmp.eq.s32.totalorder %s29, 0
      %p92 = por %p90, %p91
      %p93 = scmp.ne.s32.totalorder %s81, %s82
      %p94 = scmp.eq.s32.totalorder %s30, 1
      %p95 = por %p93, %p94
      %p97 = scmp.ne.s32.totalorder %s82, %s96
      %p98 = scmp.eq.s32.totalorder %s30, 0
      %p99 = por %p97, %p98
      %s101 = sadd.s32 %s100, 1
      %p104 = scmp.eq.s32.totalorder %s24, 1
      %p105 = scmp.ne.s32.totalorder %s100, %s102
      %p106 = scmp.eq.s32.totalorder %s24, 0
      %p107 = por %p105, %p106
      %p108 = scmp.ne.s32.totalorder %s100, %s102
      %p109 = scmp.eq.s32.totalorder %s29, 1
      %p110 = por %p108, %p109
      %p111 = scmp.ne.s32.totalorder %s102, %s103
      %p112 = scmp.eq.s32.totalorder %s29, 0
      %p113 = por %p111, %p112
      %p114 = scmp.ne.s32.totalorder %s102, %s103
      %p115 = scmp.eq.s32.totalorder %s30, 1
      %p116 = por %p114, %p115
      %p118 = scmp.ne.s32.totalorder %s103, %s117
      %p119 = scmp.eq.s32.totalorder %s30, 0
      %p120 = por %p118, %p119
      %s122 = sadd.s32 %s121, 1
      %p125 = scmp.eq.s32.totalorder %s24, 1
      %p126 = scmp.ne.s32.totalorder %s121, %s123
      %p127 = scmp.eq.s32.totalorder %s24, 0
      %p128 = por %p126, %p127
      %p129 = scmp.ne.s32.totalorder %s121, %s123
      %p130 = scmp.eq.s32.totalorder %s29, 1
      %p131 = por %p129, %p130
      %p132 = scmp.ne.s32.totalorder %s123, %s124
      %p133 = scmp.eq.s32.totalorder %s29, 0
      %p134 = por %p132, %p133
      %p135 = scmp.ne.s32.totalorder %s123, %s124
      %p136 = scmp.eq.s32.totalorder %s30, 1
      %p137 = por %p135, %p136
      %p139 = scmp.ne.s32.totalorder %s124, %s138
      %p140 = scmp.eq.s32.totalorder %s30, 0
      %p141 = por %p139, %p140
      %s143 = sadd.s32 %s142, 1
      %p146 = scmp.eq.s32.totalorder %s24, 1
      %p147 = scmp.ne.s32.totalorder %s142, %s144
      %p148 = scmp.eq.s32.totalorder %s24, 0
      %p149 = por %p147, %p148
      %p150 = scmp.ne.s32.totalorder %s142, %s144
      %p151 = scmp.eq.s32.totalorder %s29, 1
      %p152 = por %p150, %p151
      %p153 = scmp.ne.s32.totalorder %s144, %s145
      %p154 = scmp.eq.s32.totalorder %s29, 0
      %p155 = por %p153, %p154
      %p156 = scmp.ne.s32.totalorder %s144, %s145
      %p157 = scmp.eq.s32.totalorder %s30, 1
      %p158 = por %p156, %p157
      %p160 = scmp.ne.s32.totalorder %s145, %s159
      %p161 = scmp.eq.s32.totalorder %s30, 0
      %p162 = por %p160, %p161
      %s164 = sadd.s32 %s163, 1
      %p167 = scmp.eq.s32.totalorder %s24, 1
      %p168 = scmp.ne.s32.totalorder %s163, %s165
      %p169 = scmp.eq.s32.totalorder %s24, 0
      %p170 = por %p168, %p169
      %p171 = scmp.ne.s32.totalorder %s163, %s165
      %p172 = scmp.eq.s32.totalorder %s29, 1
      %p173 = por %p171, %p172
      %p174 = scmp.ne.s32.totalorder %s165, %s166
      %p175 = scmp.eq.s32.totalorder %s29, 0
      %p176 = por %p174, %p175
      %p177 = scmp.ne.s32.totalorder %s165, %s166
      %p178 = scmp.eq.s32.totalorder %s30, 1
      %p179 = por %p177, %p178
      %p181 = scmp.ne.s32.totalorder %s166, %s180
      %p182 = scmp.eq.s32.totalorder %s30, 0
      %p183 = por %p181, %p182
      %s185 = sadd.s32 %s184, 1
      %p188 = scmp.eq.s32.totalorder %s24, 1
      %p189 = scmp.ne.s32.totalorder %s184, %s186
      %p190 = scmp.eq.s32.totalorder %s24, 0
      %p191 = por %p189, %p190
      %p192 = scmp.ne.s32.totalorder %s184, %s186
      %p193 = scmp.eq.s32.totalorder %s29, 1
      %p194 = por %p192, %p193
      %p195 = scmp.ne.s32.totalorder %s186, %s187
      %p196 = scmp.eq.s32.totalorder %s29, 0
      %p197 = por %p195, %p196
      %p198 = scmp.ne.s32.totalorder %s186, %s187
      %p199 = scmp.eq.s32.totalorder %s30, 1
      %p200 = por %p198, %p199
      %p202 = scmp.ne.s32.totalorder %s187, %s201
      %p203 = scmp.eq.s32.totalorder %s30, 0
      %p204 = por %p202, %p203
      %s206 = sadd.s32 %s205, 1
      %p209 = scmp.eq.s32.totalorder %s24, 1
      %p210 = scmp.ne.s32.totalorder %s205, %s207
      %p211 = scmp.eq.s32.totalorder %s24, 0
      %p212 = por %p210, %p211
      %p213 = scmp.ne.s32.totalorder %s205, %s207
      %p214 = scmp.eq.s32.totalorder %s29, 1
      %p215 = por %p213, %p214
      %p216 = scmp.ne.s32.totalorder %s207, %s208
      %p217 = scmp.eq.s32.totalorder %s29, 0
      %p218 = por %p216, %p217
      %p219 = scmp.ne.s32.totalorder %s207, %s208
      %p220 = scmp.eq.s32.totalorder %s30, 1
      %p221 = por %p219, %p220
      %p223 = scmp.ne.s32.totalorder %s208, %s222
      %p224 = scmp.eq.s32.totalorder %s30, 0
      %p225 = por %p223, %p224
      %s227 = sadd.s32 %s226, 1
      %p230 = scmp.eq.s32.totalorder %s24, 1
      %p231 = scmp.ne.s32.totalorder %s226, %s228
      %p232 = scmp.eq.s32.totalorder %s24, 0
      %p233 = por %p231, %p232
      %p234 = scmp.ne.s32.totalorder %s226, %s228
      %p235 = scmp.eq.s32.totalorder %s29, 1
      %p236 = por %p234, %p235
      %p237 = scmp.ne.s32.totalorder %s228, %s229
      %p238 = scmp.eq.s32.totalorder %s29, 0
      %p239 = por %p237, %p238
      %p240 = scmp.ne.s32.totalorder %s228, %s229
      %p241 = scmp.eq.s32.totalorder %s30, 1
      %p242 = por %p240, %p241
      %p244 = scmp.ne.s32.totalorder %s229, %s243
      %p245 = scmp.eq.s32.totalorder %s30, 0
      %p246 = por %p244, %p245
      %s248 = sadd.s32 %s247, 1
      %p251 = scmp.eq.s32.totalorder %s24, 1
      %p252 = scmp.ne.s32.totalorder %s247, %s249
      %p253 = scmp.eq.s32.totalorder %s24, 0
      %p254 = por %p252, %p253
      %p255 = scmp.ne.s32.totalorder %s247, %s249
      %p256 = scmp.eq.s32.totalorder %s29, 1
      %p257 = por %p255, %p256
      %p258 = scmp.ne.s32.totalorder %s249, %s250
      %p259 = scmp.eq.s32.totalorder %s29, 0
      %p260 = por %p258, %p259
      %p261 = scmp.ne.s32.totalorder %s249, %s250
      %p262 = scmp.eq.s32.totalorder %s30, 1
      %p263 = por %p261, %p262
      %p265 = scmp.ne.s32.totalorder %s250, %s264
      %p266 = scmp.eq.s32.totalorder %s30, 0
      %p267 = por %p265, %p266
      %s269 = sadd.s32 %s268, 1
      %p272 = scmp.eq.s32.totalorder %s24, 1
      %p273 = scmp.ne.s32.totalorder %s268, %s270
      %p274 = scmp.eq.s32.totalorder %s24, 0
      %p275 = por %p273, %p274
      %p276 = scmp.ne.s32.totalorder %s268, %s270
      %p277 = scmp.eq.s32.totalorder %s29, 1
      %p278 = por %p276, %p277
      %p279 = scmp.ne.s32.totalorder %s270, %s271
      %p280 = scmp.eq.s32.totalorder %s29, 0
      %p281 = por %p279, %p280
      %p282 = scmp.ne.s32.totalorder %s270, %s271
      %p283 = scmp.eq.s32.totalorder %s30, 1
      %p284 = por %p282, %p283
      %p286 = scmp.ne.s32.totalorder %s271, %s285
      %p287 = scmp.eq.s32.totalorder %s30, 0
      %p288 = por %p286, %p287
      %s290 = sadd.s32 %s289, 1
      %p293 = scmp.eq.s32.totalorder %s24, 1
      %p294 = scmp.ne.s32.totalorder %s289, %s291
      %p295 = scmp.eq.s32.totalorder %s24, 0
      %p296 = por %p294, %p295
      %p297 = scmp.ne.s32.totalorder %s289, %s291
      %p298 = scmp.eq.s32.totalorder %s29, 1
      %p299 = por %p297, %p298
      %p300 = scmp.ne.s32.totalorder %s291, %s292
      %p301 = scmp.eq.s32.totalorder %s29, 0
      %p302 = por %p300, %p301
      %p303 = scmp.ne.s32.totalorder %s291, %s292
      %p304 = scmp.eq.s32.totalorder %s30, 1
      %p305 = por %p303, %p304
      %p307 = scmp.ne.s32.totalorder %s292, %s306
      %p308 = scmp.eq.s32.totalorder %s30, 0
      %p309 = por %p307, %p308
      %s311 = sadd.s32 %s310, 1
      %p314 = scmp.eq.s32.totalorder %s24, 1
      %p315 = scmp.ne.s32.totalorder %s310, %s312
      %p316 = scmp.eq.s32.totalorder %s24, 0
      %p317 = por %p315, %p316
      %p318 = scmp.ne.s32.totalorder %s310, %s312
      %p319 = scmp.eq.s32.totalorder %s29, 1
      %p320 = por %p318, %p319
      %p321 = scmp.ne.s32.totalorder %s312, %s313
      %p322 = scmp.eq.s32.totalorder %s29, 0
      %p323 = por %p321, %p322
      %p324 = scmp.ne.s32.totalorder %s312, %s313
      %p325 = scmp.eq.s32.totalorder %s30, 1
      %p326 = por %p324, %p325
      %p328 = scmp.ne.s32.totalorder %s313, %s327
      %p329 = scmp.eq.s32.totalorder %s30, 0
      %p330 = por %p328, %p329
      %s332 = sadd.s32 %s331, 1
      %p335 = scmp.eq.s32.totalorder %s24, 1
      %p336 = scmp.ne.s32.totalorder %s331, %s333
      %p337 = scmp.eq.s32.totalorder %s24, 0
      %p338 = por %p336, %p337
      %p339 = scmp.ne.s32.totalorder %s331, %s333
      %p340 = scmp.eq.s32.totalorder %s29, 1
      %p341 = por %p339, %p340
      %p342 = scmp.ne.s32.totalorder %s333, %s334
      %p343 = scmp.eq.s32.totalorder %s29, 0
      %p344 = por %p342, %p343
      %p345 = scmp.ne.s32.totalorder %s333, %s334
      %p346 = scmp.eq.s32.totalorder %s30, 1
      %p347 = por %p345, %p346
      %p349 = scmp.ne.s32.totalorder %s334, %s348
      %p350 = scmp.eq.s32.totalorder %s30, 0
      %p351 = por %p349, %p350
      %s352 = ssub.s32 %s24, %s31
      %p353 = scmp.eq.s32.totalorder %s352, 0
      %s355 = sadd.s32 %s354, 1
      %s356 = scalar_select %p353, %s354, %s355
      %p359 = pneg %p353
      %p360 = scmp.eq.s32.totalorder %s24, 1
      %p361 = por %p359, %p360
      %p362 = scmp.ne.s32.totalorder %s354, %s357
      %p363 = scmp.eq.s32.totalorder %s24, 0
      %p364 = por %p362, %p363
      %p365 = scmp.ne.s32.totalorder %s354, %s357
      %p366 = scmp.eq.s32.totalorder %s29, 1
      %p367 = por %p365, %p366
      %p368 = scmp.ne.s32.totalorder %s357, %s358
      %p369 = scmp.eq.s32.totalorder %s29, 0
      %p370 = por %p368, %p369
      %p371 = scmp.ne.s32.totalorder %s357, %s358
      %p372 = scmp.eq.s32.totalorder %s30, 1
      %p373 = por %p371, %p372
      %p375 = scmp.ne.s32.totalorder %s358, %s374
      %p376 = scmp.eq.s32.totalorder %s30, 0
      %p377 = por %p375, %p376
      %p378 = scmp.le.s32.totalorder 1, %s24
      %p379 = scmp.lt.s32.totalorder %s24, 3
      %p380 = pnand %p378, %p379
      %p381 = pneg %p380
      // Predicated region
      $region9: #{lenet5_forward.1} parent=5 // pred_check
        _
      $region10: #{lenet5_forward.1} parent=5 // pred_check_branch
        %383 = sbr.rel (%p380) target = $region12
      $region11: #{lenet5_forward.1} parent=5 // pred_region
        %s384 = ssub.s32 %s24, 1
        // Predicated region
        $region13: #{lenet5_forward.1} parent=11 // pred_check
          %p385 = pneg %p71
        $region14: #{lenet5_forward.1} parent=11 // pred_check_branch
          %387 = sbr.rel (%p385) target = $region16
        $region15: #{lenet5_forward.1} parent=11 // pred_region
          _
        $region16: #{lenet5_forward.1} parent=11 // pred_fallthru
          _
        // Predicated region
        $region17: #{lenet5_forward.1} parent=11 // pred_check
          %p388 = pneg %p92
        $region18: #{lenet5_forward.1} parent=11 // pred_check_branch
          %390 = sbr.rel (%p388) target = $region20
        $region19: #{lenet5_forward.1} parent=11 // pred_region
          _
        $region20: #{lenet5_forward.1} parent=11 // pred_fallthru
          _
        // Predicated region
        $region21: #{lenet5_forward.1} parent=11 // pred_check
          %p391 = pneg %p113
        $region22: #{lenet5_forward.1} parent=11 // pred_check_branch
          %393 = sbr.rel (%p391) target = $region24
        $region23: #{lenet5_forward.1} parent=11 // pred_region
          _
        $region24: #{lenet5_forward.1} parent=11 // pred_fallthru
          _
        // Predicated region
        $region25: #{lenet5_forward.1} parent=11 // pred_check
          %p394 = pneg %p134
        $region26: #{lenet5_forward.1} parent=11 // pred_check_branch
          %396 = sbr.rel (%p394) target = $region28
        $region27: #{lenet5_forward.1} parent=11 // pred_region
          _
        $region28: #{lenet5_forward.1} parent=11 // pred_fallthru
          _
        // Predicated region
        $region29: #{lenet5_forward.1} parent=11 // pred_check
          %p397 = pneg %p155
        $region30: #{lenet5_forward.1} parent=11 // pred_check_branch
          %399 = sbr.rel (%p397) target = $region32
        $region31: #{lenet5_forward.1} parent=11 // pred_region
          _
        $region32: #{lenet5_forward.1} parent=11 // pred_fallthru
          _
        // Predicated region
        $region33: #{lenet5_forward.1} parent=11 // pred_check
          %p400 = pneg %p176
        $region34: #{lenet5_forward.1} parent=11 // pred_check_branch
          %402 = sbr.rel (%p400) target = $region36
        $region35: #{lenet5_forward.1} parent=11 // pred_region
          _
        $region36: #{lenet5_forward.1} parent=11 // pred_fallthru
          _
        // Predicated region
        $region37: #{lenet5_forward.1} parent=11 // pred_check
          %p403 = pneg %p197
        $region38: #{lenet5_forward.1} parent=11 // pred_check_branch
          %405 = sbr.rel (%p403) target = $region40
        $region39: #{lenet5_forward.1} parent=11 // pred_region
          _
        $region40: #{lenet5_forward.1} parent=11 // pred_fallthru
          _
        // Predicated region
        $region41: #{lenet5_forward.1} parent=11 // pred_check
          %p406 = pneg %p218
        $region42: #{lenet5_forward.1} parent=11 // pred_check_branch
          %408 = sbr.rel (%p406) target = $region44
        $region43: #{lenet5_forward.1} parent=11 // pred_region
          _
        $region44: #{lenet5_forward.1} parent=11 // pred_fallthru
          _
        // Predicated region
        $region45: #{lenet5_forward.1} parent=11 // pred_check
          %p409 = pneg %p239
        $region46: #{lenet5_forward.1} parent=11 // pred_check_branch
          %411 = sbr.rel (%p409) target = $region48
        $region47: #{lenet5_forward.1} parent=11 // pred_region
          _
        $region48: #{lenet5_forward.1} parent=11 // pred_fallthru
          _
        // Predicated region
        $region49: #{lenet5_forward.1} parent=11 // pred_check
          %p412 = pneg %p260
        $region50: #{lenet5_forward.1} parent=11 // pred_check_branch
          %414 = sbr.rel (%p412) target = $region52
        $region51: #{lenet5_forward.1} parent=11 // pred_region
          _
        $region52: #{lenet5_forward.1} parent=11 // pred_fallthru
          _
        // Predicated region
        $region53: #{lenet5_forward.1} parent=11 // pred_check
          %p415 = pneg %p281
        $region54: #{lenet5_forward.1} parent=11 // pred_check_branch
          %417 = sbr.rel (%p415) target = $region56
        $region55: #{lenet5_forward.1} parent=11 // pred_region
          _
        $region56: #{lenet5_forward.1} parent=11 // pred_fallthru
          _
        // Predicated region
        $region57: #{lenet5_forward.1} parent=11 // pred_check
          %p418 = pneg %p302
        $region58: #{lenet5_forward.1} parent=11 // pred_check_branch
          %420 = sbr.rel (%p418) target = $region60
        $region59: #{lenet5_forward.1} parent=11 // pred_region
          _
        $region60: #{lenet5_forward.1} parent=11 // pred_fallthru
          _
        // Predicated region
        $region61: #{lenet5_forward.1} parent=11 // pred_check
          %p421 = pneg %p323
        $region62: #{lenet5_forward.1} parent=11 // pred_check_branch
          %423 = sbr.rel (%p421) target = $region64
        $region63: #{lenet5_forward.1} parent=11 // pred_region
          _
        $region64: #{lenet5_forward.1} parent=11 // pred_fallthru
          _
        // Predicated region
        $region65: #{lenet5_forward.1} parent=11 // pred_check
          %p424 = pneg %p344
        $region66: #{lenet5_forward.1} parent=11 // pred_check_branch
          %426 = sbr.rel (%p424) target = $region68
        $region67: #{lenet5_forward.1} parent=11 // pred_region
          _
        $region68: #{lenet5_forward.1} parent=11 // pred_fallthru
          _
      $region12: #{lenet5_forward.1} parent=5 // pred_fallthru
        _
      %p427 = scmp.lt.s32.totalorder %s24, 2
      // Predicated region
      $region69: #{lenet5_forward.1} parent=5 // pred_check
        %p428 = pneg %p427
      $region70: #{lenet5_forward.1} parent=5 // pred_check_branch
        %430 = sbr.rel (%p428) target = $region72
      $region71: #{lenet5_forward.1} parent=5 // pred_region
        // Predicated region
        $region73: #{lenet5_forward.1} parent=71 // pred_check
          %p431 = pneg %p44
        $region74: #{lenet5_forward.1} parent=71 // pred_check_branch
          %433 = sbr.rel (%p431) target = $region76
        $region75: #{lenet5_forward.1} parent=71 // pred_region
          %p434 = scmp.lt.s32.totalorder %s24, 1
          %s435 = scalar_select %p434, %s24, 1
          %s436 = smul.addr %s435, 4
          %s437 = smul.addr %s436, 8
          %s438 = scalar_lea.vmem %s0, %s437
        $region76: #{lenet5_forward.1} parent=71 // pred_fallthru
          _
      $region72: #{lenet5_forward.1} parent=5 // pred_fallthru
        _
      %p439 = scmp.le.s32.totalorder 1, %s24
      %p440 = scmp.lt.s32.totalorder %s24, 3
      %p441 = pnand %p439, %p440
      %p442 = pneg %p441
      // Predicated region
      $region77: #{lenet5_forward.1} parent=5 // pred_check
        _
      $region78: #{lenet5_forward.1} parent=5 // pred_check_branch
        %444 = sbr.rel (%p441) target = $region80
      $region79: #{lenet5_forward.1} parent=5 // pred_region
        %s445 = ssub.s32 %s24, 1
        %p446 = scmp.lt.s32.totalorder %s29, 1
        %s447 = scalar_select %p446, %s29, 1
        %s448 = smul.addr %s447, 4
        %s449 = smul.addr %s448, 8
        %s450 = scalar_lea.vmem %s0, %s449
        %p451 = pneg %p50
        %p452 = pneg %p47
        %p453 = pneg %p71
        %p454 = pneg %p68
        %p455 = pneg %p92
        %p456 = pneg %p89
        %p457 = pneg %p113
        %p458 = pneg %p110
        %p459 = pneg %p134
        %p460 = pneg %p131
        %p461 = pneg %p155
        %p462 = pneg %p152
        %p463 = pneg %p176
        %p464 = pneg %p173
        %p465 = pneg %p197
        %p466 = pneg %p194
        %p467 = pneg %p218
        %p468 = pneg %p215
        %p469 = pneg %p239
        %p470 = pneg %p236
        %p471 = pneg %p260
        %p472 = pneg %p257
        %p473 = pneg %p281
        %p474 = pneg %p278
        %p475 = pneg %p302
        %p476 = pneg %p299
        %p477 = pneg %p323
        %p478 = pneg %p320
        %p479 = pneg %p344
        %p480 = pneg %p341
        %p481 = pneg %p370
        %p482 = pneg %p367
        %s483 = sand.u32 %s357, 1
        %s484 = scalar_lea.sflag [#allocation5], %s483
        %s485 = sand.u32 %s357, 1
        %s486 = scalar_lea.vmem [#allocation4], %s485
        %p487 = scmp.lt.s32.totalorder %s29, 1
        %s488 = scalar_select %p487, %s29, 1
        %s489 = smul.addr %s488, 4
        %s490 = smul.addr %s489, 8
        %s491 = scalar_lea.vmem %s0, %s490
        %v492 = vld [vmem:[%s2] sm:$0x3]
        %v493 = vld [vmem:[%s491] sm:$0xff]
        %v494 = vld [vmem:[%s491 + $0x8] sm:$0xff]
        %v495 = vld [vmem:[%s491 + $0x10] sm:$0xff]
        %v496 = vld [vmem:[%s491 + $0x18] sm:$0xf]
        %v497 = vld [vmem:[%s1] sm:$0xff]
        %v498 = vld [vmem:[%s1 + $0x8] sm:$0xff]
        %v499 = vld [vmem:[%s1 + $0x10] sm:$0xff]
        %v500 = vld [vmem:[%s1 + $0x18] sm:$0xff]
        %v501 = vld [vmem:[%s1 + $0x20] sm:$0xff]
        %v502 = vld [vmem:[%s1 + $0x28] sm:$0xff]
        %v503 = vld [vmem:[%s1 + $0x30] sm:$0xff]
        %v504 = vld [vmem:[%s1 + $0x38] sm:$0xff]
        %vm505 = vcmask 261120
        %v507 = vsel %vm505, %v493, 0
        %v510 = vsel %vm505, %v494, 0
        %v513 = vsel %vm505, %v495, 0
        %v516 = vsel %vm505, %v496, 0
        %518 = vmatpush.msra.mxu0 0.0
        %519 = vmatpush.msra.mxu0 0.0
        %520 = vmatpush.msra.mxu0 0.0
        %521 = vmatpush.msra.mxu0 0.0
        %522 = vmatpush.msra.mxu0 0.0
        %523 = vmatpush.msra.mxu0 0.0
        %524 = vmatpush.msra.mxu0 0.0
        %525 = vmatpush.msra.mxu0 0.0
        %526 = vmatpush.msra.mxu0 0.0
        %527 = vmatpush.msra.mxu0 0.0
        %528 = vmatpush.msra.mxu0 0.0
        %529 = vmatpush.msra.mxu0 0.0
        %530 = vmatpush.msra.mxu0 %v503
        %531 = vmatpush.msra.mxu0 %v501
        %532 = vmatpush.msra.mxu0 %v499
        %533 = vmatpush.msra.mxu0 %v497
        %534 = vmatmul.f32.gmra.mxu0 %v507
        %v535 = vpop.f32.mrf.mxu0
        %v536 = vadd.f32 0.0, %v535
        %537 = vmatmul.f32.gmra.mxu0 %v510
        %v538 = vpop.f32.mrf.mxu0
        %v539 = vadd.f32 0.0, %v538
        %540 = vmatmul.f32.gmra.mxu0 %v513
        %v541 = vpop.f32.mrf.mxu0
        %v542 = vadd.f32 0.0, %v541
        %543 = vmatmul.f32.gmra.mxu0 %v516
        %v544 = vpop.f32.mrf.mxu0
        %v545 = vadd.f32 0.0, %v544
        %546 = vdwg.mxu0
        %547 = vmatpush.msra.mxu0 0.0
        %548 = vmatpush.msra.mxu0 0.0
        %549 = vmatpush.msra.mxu0 0.0
        %550 = vmatpush.msra.mxu0 0.0
        %551 = vmatpush.msra.mxu0 0.0
        %552 = vmatpush.msra.mxu0 0.0
        %553 = vmatpush.msra.mxu0 0.0
        %554 = vmatpush.msra.mxu0 0.0
        %555 = vmatpush.msra.mxu0 0.0
        %556 = vmatpush.msra.mxu0 0.0
        %557 = vmatpush.msra.mxu0 0.0
        %558 = vmatpush.msra.mxu0 0.0
        %559 = vmatpush.msra.mxu0 %v504
        %560 = vmatpush.msra.mxu0 %v502
        %561 = vmatpush.msra.mxu0 %v500
        %562 = vmatpush.msra.mxu0 %v498
        %563 = vmatmul.f32.gmra.mxu0 %v507
        %v564 = vpop.f32.mrf.mxu0
        %v565 = vadd.f32 0.0, %v564
        %566 = vmatmul.f32.gmra.mxu0 %v510
        %v567 = vpop.f32.mrf.mxu0
        %v568 = vadd.f32 0.0, %v567
        %569 = vmatmul.f32.gmra.mxu0 %v513
        %v570 = vpop.f32.mrf.mxu0
        %v571 = vadd.f32 0.0, %v570
        %572 = vmatmul.f32.gmra.mxu0 %v516
        %v573 = vpop.f32.mrf.mxu0
        %v574 = vadd.f32 0.0, %v573
        %575 = vdwg.mxu0
        %v577 = vperm.slane %v492, 0
        %v578 = vperm.slane %v492, 1
        %v581 = vadd.f32 %v577, %v536
        %v582 = vadd.f32 %v578, %v565
        %v583 = vadd.f32 %v577, %v539
        %v584 = vadd.f32 %v578, %v568
        %v585 = vadd.f32 %v577, %v542
        %v586 = vadd.f32 %v578, %v571
        %v587 = vadd.f32 %v577, %v545
        %v588 = vadd.f32 %v578, %v574
        %v589 = vld [vmem:[%s491 + $0x1] sm:$0xff]
        %v590 = vld [vmem:[%s491 + $0x9] sm:$0xff]
        %v591 = vld [vmem:[%s491 + $0x11] sm:$0xff]
        %v592 = vld [vmem:[%s491 + $0x19] sm:$0xf]
        %s593 = scalar_lea.vmem %s1, 64
        %v594 = vld [vmem:[%s593] sm:$0xff]
        %v595 = vld [vmem:[%s593 + $0x8] sm:$0xff]
        %v596 = vld [vmem:[%s593 + $0x10] sm:$0xff]
        %v597 = vld [vmem:[%s593 + $0x18] sm:$0xff]
        %v598 = vld [vmem:[%s593 + $0x20] sm:$0xff]
        %v599 = vld [vmem:[%s593 + $0x28] sm:$0xff]
        %v600 = vld [vmem:[%s593 + $0x30] sm:$0xff]
        %v601 = vld [vmem:[%s593 + $0x38] sm:$0xff]
        %v603 = vsel %vm505, %v589, 0
        %v606 = vsel %vm505, %v590, 0
        %v609 = vsel %vm505, %v591, 0
        %v612 = vsel %vm505, %v592, 0
        %614 = vmatpush.msra.mxu0 0.0
        %615 = vmatpush.msra.mxu0 0.0
        %616 = vmatpush.msra.mxu0 0.0
        %617 = vmatpush.msra.mxu0 0.0
        %618 = vmatpush.msra.mxu0 0.0
        %619 = vmatpush.msra.mxu0 0.0
        %620 = vmatpush.msra.mxu0 0.0
        %621 = vmatpush.msra.mxu0 0.0
        %622 = vmatpush.msra.mxu0 0.0
        %623 = vmatpush.msra.mxu0 0.0
        %624 = vmatpush.msra.mxu0 0.0
        %625 = vmatpush.msra.mxu0 0.0
        %626 = vmatpush.msra.mxu0 %v600
        %627 = vmatpush.msra.mxu0 %v598
        %628 = vmatpush.msra.mxu0 %v596
        %629 = vmatpush.msra.mxu0 %v594
        %630 = vmatmul.f32.gmra.mxu0 %v603
        %v631 = vpop.f32.mrf.mxu0
        %v632 = vadd.f32 0.0, %v631
        %633 = vmatmul.f32.gmra.mxu0 %v606
        %v634 = vpop.f32.mrf.mxu0
        %v635 = vadd.f32 0.0, %v634
        %636 = vmatmul.f32.gmra.mxu0 %v609
        %v637 = vpop.f32.mrf.mxu0
        %v638 = vadd.f32 0.0, %v637
        %639 = vmatmul.f32.gmra.mxu0 %v612
        %v640 = vpop.f32.mrf.mxu0
        %v641 = vadd.f32 0.0, %v640
        %642 = vdwg.mxu0
        %643 = vmatpush.msra.mxu0 0.0
        %644 = vmatpush.msra.mxu0 0.0
        %645 = vmatpush.msra.mxu0 0.0
        %646 = vmatpush.msra.mxu0 0.0
        %647 = vmatpush.msra.mxu0 0.0
        %648 = vmatpush.msra.mxu0 0.0
        %649 = vmatpush.msra.mxu0 0.0
        %650 = vmatpush.msra.mxu0 0.0
        %651 = vmatpush.msra.mxu0 0.0
        %652 = vmatpush.msra.mxu0 0.0
        %653 = vmatpush.msra.mxu0 0.0
        %654 = vmatpush.msra.mxu0 0.0
        %655 = vmatpush.msra.mxu0 %v601
        %656 = vmatpush.msra.mxu0 %v599
        %657 = vmatpush.msra.mxu0 %v597
        %658 = vmatpush.msra.mxu0 %v595
        %659 = vmatmul.f32.gmra.mxu0 %v603
        %v660 = vpop.f32.mrf.mxu0
        %v661 = vadd.f32 0.0, %v660
        %662 = vmatmul.f32.gmra.mxu0 %v606
        %v663 = vpop.f32.mrf.mxu0
        %v664 = vadd.f32 0.0, %v663
        %665 = vmatmul.f32.gmra.mxu0 %v609
        %v666 = vpop.f32.mrf.mxu0
        %v667 = vadd.f32 0.0, %v666
        %668 = vmatmul.f32.gmra.mxu0 %v612
        %v669 = vpop.f32.mrf.mxu0
        %v670 = vadd.f32 0.0, %v669
        %671 = vdwg.mxu0
        %v672 = vadd.f32 %v581, %v632
        %v673 = vadd.f32 %v582, %v661
        %v674 = vadd.f32 %v583, %v635
        %v675 = vadd.f32 %v584, %v664
        %v676 = vadd.f32 %v585, %v638
        %v677 = vadd.f32 %v586, %v667
        %v678 = vadd.f32 %v587, %v641
        %v679 = vadd.f32 %v588, %v670
        %v680 = vld [vmem:[%s491 + $0x2] sm:$0xff]
        %v681 = vld [vmem:[%s491 + $0xa] sm:$0xff]
        %v682 = vld [vmem:[%s491 + $0x12] sm:$0xff]
        %v683 = vld [vmem:[%s491 + $0x1a] sm:$0xf]
        %s684 = scalar_lea.vmem %s1, 128
        %v685 = vld [vmem:[%s684] sm:$0xff]
        %v686 = vld [vmem:[%s684 + $0x8] sm:$0xff]
        %v687 = vld [vmem:[%s684 + $0x10] sm:$0xff]
        %v688 = vld [vmem:[%s684 + $0x18] sm:$0xff]
        %v689 = vld [vmem:[%s684 + $0x20] sm:$0xff]
        %v690 = vld [vmem:[%s684 + $0x28] sm:$0xff]
        %v691 = vld [vmem:[%s684 + $0x30] sm:$0xff]
        %v692 = vld [vmem:[%s684 + $0x38] sm:$0xff]
        %v694 = vsel %vm505, %v680, 0
        %v697 = vsel %vm505, %v681, 0
        %v700 = vsel %vm505, %v682, 0
        %v703 = vsel %vm505, %v683, 0
        %705 = vmatpush.msra.mxu0 0.0
        %706 = vmatpush.msra.mxu0 0.0
        %707 = vmatpush.msra.mxu0 0.0
        %708 = vmatpush.msra.mxu0 0.0
        %709 = vmatpush.msra.mxu0 0.0
        %710 = vmatpush.msra.mxu0 0.0
        %711 = vmatpush.msra.mxu0 0.0
        %712 = vmatpush.msra.mxu0 0.0
        %713 = vmatpush.msra.mxu0 0.0
        %714 = vmatpush.msra.mxu0 0.0
        %715 = vmatpush.msra.mxu0 0.0
        %716 = vmatpush.msra.mxu0 0.0
        %717 = vmatpush.msra.mxu0 %v691
        %718 = vmatpush.msra.mxu0 %v689
        %719 = vmatpush.msra.mxu0 %v687
        %720 = vmatpush.msra.mxu0 %v685
        %721 = vmatmul.f32.gmra.mxu0 %v694
        %v722 = vpop.f32.mrf.mxu0
        %v723 = vadd.f32 0.0, %v722
        %724 = vmatmul.f32.gmra.mxu0 %v697
        %v725 = vpop.f32.mrf.mxu0
        %v726 = vadd.f32 0.0, %v725
        %727 = vmatmul.f32.gmra.mxu0 %v700
        %v728 = vpop.f32.mrf.mxu0
        %v729 = vadd.f32 0.0, %v728
        %730 = vmatmul.f32.gmra.mxu0 %v703
        %v731 = vpop.f32.mrf.mxu0
        %v732 = vadd.f32 0.0, %v731
        %733 = vdwg.mxu0
        %734 = vmatpush.msra.mxu0 0.0
        %735 = vmatpush.msra.mxu0 0.0
        %736 = vmatpush.msra.mxu0 0.0
        %737 = vmatpush.msra.mxu0 0.0
        %738 = vmatpush.msra.mxu0 0.0
        %739 = vmatpush.msra.mxu0 0.0
        %740 = vmatpush.msra.mxu0 0.0
        %741 = vmatpush.msra.mxu0 0.0
        %742 = vmatpush.msra.mxu0 0.0
        %743 = vmatpush.msra.mxu0 0.0
        %744 = vmatpush.msra.mxu0 0.0
        %745 = vmatpush.msra.mxu0 0.0
        %746 = vmatpush.msra.mxu0 %v692
        %747 = vmatpush.msra.mxu0 %v690
        %748 = vmatpush.msra.mxu0 %v688
        %749 = vmatpush.msra.mxu0 %v686
        %750 = vmatmul.f32.gmra.mxu0 %v694
        %v751 = vpop.f32.mrf.mxu0
        %v752 = vadd.f32 0.0, %v751
        %753 = vmatmul.f32.gmra.mxu0 %v697
        %v754 = vpop.f32.mrf.mxu0
        %v755 = vadd.f32 0.0, %v754
        %756 = vmatmul.f32.gmra.mxu0 %v700
        %v757 = vpop.f32.mrf.mxu0
        %v758 = vadd.f32 0.0, %v757
        %759 = vmatmul.f32.gmra.mxu0 %v703
        %v760 = vpop.f32.mrf.mxu0
        %v761 = vadd.f32 0.0, %v760
        %762 = vdwg.mxu0
        %v763 = vadd.f32 %v672, %v723
        %v764 = vadd.f32 %v673, %v752
        %v765 = vadd.f32 %v674, %v726
        %v766 = vadd.f32 %v675, %v755
        %v767 = vadd.f32 %v676, %v729
        %v768 = vadd.f32 %v677, %v758
        %v769 = vadd.f32 %v678, %v732
        %v770 = vadd.f32 %v679, %v761
        %v771 = vld [vmem:[%s491 + $0x3] sm:$0xff]
        %v772 = vld [vmem:[%s491 + $0xb] sm:$0xff]
        %v773 = vld [vmem:[%s491 + $0x13] sm:$0xff]
        %v774 = vld [vmem:[%s491 + $0x1b] sm:$0xf]
        %s775 = scalar_lea.vmem %s1, 192
        %v776 = vld [vmem:[%s775] sm:$0xff]
        %v777 = vld [vmem:[%s775 + $0x8] sm:$0xff]
        %v778 = vld [vmem:[%s775 + $0x10] sm:$0xff]
        %v779 = vld [vmem:[%s775 + $0x18] sm:$0xff]
        %v780 = vld [vmem:[%s775 + $0x20] sm:$0xff]
        %v781 = vld [vmem:[%s775 + $0x28] sm:$0xff]
        %v782 = vld [vmem:[%s775 + $0x30] sm:$0xff]
        %v783 = vld [vmem:[%s775 + $0x38] sm:$0xff]
        %v785 = vsel %vm505, %v771, 0
        %v788 = vsel %vm505, %v772, 0
        %v791 = vsel %vm505, %v773, 0
        %v794 = vsel %vm505, %v774, 0
        %796 = vmatpush.msra.mxu0 0.0
        %797 = vmatpush.msra.mxu0 0.0
        %798 = vmatpush.msra.mxu0 0.0
        %799 = vmatpush.msra.mxu0 0.0
        %800 = vmatpush.msra.mxu0 0.0
        %801 = vmatpush.msra.mxu0 0.0
        %802 = vmatpush.msra.mxu0 0.0
        %803 = vmatpush.msra.mxu0 0.0
        %804 = vmatpush.msra.mxu0 0.0
        %805 = vmatpush.msra.mxu0 0.0
        %806 = vmatpush.msra.mxu0 0.0
        %807 = vmatpush.msra.mxu0 0.0
        %808 = vmatpush.msra.mxu0 %v782
        %809 = vmatpush.msra.mxu0 %v780
        %810 = vmatpush.msra.mxu0 %v778
        %811 = vmatpush.msra.mxu0 %v776
        %812 = vmatmul.f32.gmra.mxu0 %v785
        %v813 = vpop.f32.mrf.mxu0
        %v814 = vadd.f32 0.0, %v813
        %815 = vmatmul.f32.gmra.mxu0 %v788
        %v816 = vpop.f32.mrf.mxu0
        %v817 = vadd.f32 0.0, %v816
        %818 = vmatmul.f32.gmra.mxu0 %v791
        %v819 = vpop.f32.mrf.mxu0
        %v820 = vadd.f32 0.0, %v819
        %821 = vmatmul.f32.gmra.mxu0 %v794
        %v822 = vpop.f32.mrf.mxu0
        %v823 = vadd.f32 0.0, %v822
        %824 = vdwg.mxu0
        %825 = vmatpush.msra.mxu0 0.0
        %826 = vmatpush.msra.mxu0 0.0
        %827 = vmatpush.msra.mxu0 0.0
        %828 = vmatpush.msra.mxu0 0.0
        %829 = vmatpush.msra.mxu0 0.0
        %830 = vmatpush.msra.mxu0 0.0
        %831 = vmatpush.msra.mxu0 0.0
        %832 = vmatpush.msra.mxu0 0.0
        %833 = vmatpush.msra.mxu0 0.0
        %834 = vmatpush.msra.mxu0 0.0
        %835 = vmatpush.msra.mxu0 0.0
        %836 = vmatpush.msra.mxu0 0.0
        %837 = vmatpush.msra.mxu0 %v783
        %838 = vmatpush.msra.mxu0 %v781
        %839 = vmatpush.msra.mxu0 %v779
        %840 = vmatpush.msra.mxu0 %v777
        %841 = vmatmul.f32.gmra.mxu0 %v785
        %v842 = vpop.f32.mrf.mxu0
        %v843 = vadd.f32 0.0, %v842
        %844 = vmatmul.f32.gmra.mxu0 %v788
        %v845 = vpop.f32.mrf.mxu0
        %v846 = vadd.f32 0.0, %v845
        %847 = vmatmul.f32.gmra.mxu0 %v791
        %v848 = vpop.f32.mrf.mxu0
        %v849 = vadd.f32 0.0, %v848
        %850 = vmatmul.f32.gmra.mxu0 %v794
        %v851 = vpop.f32.mrf.mxu0
        %v852 = vadd.f32 0.0, %v851
        %853 = vdwg.mxu0
        %v854 = vadd.f32 %v763, %v814
        %v855 = vadd.f32 %v764, %v843
        %v856 = vadd.f32 %v765, %v817
        %v857 = vadd.f32 %v766, %v846
        %v858 = vadd.f32 %v767, %v820
        %v859 = vadd.f32 %v768, %v849
        %v860 = vadd.f32 %v769, %v823
        %v861 = vadd.f32 %v770, %v852
        %v862 = vld [vmem:[%s491 + $0x4] sm:$0xff]
        %v863 = vld [vmem:[%s491 + $0xc] sm:$0xff]
        %v864 = vld [vmem:[%s491 + $0x14] sm:$0xff]
        %v865 = vld [vmem:[%s491 + $0x1c] sm:$0xf]
        %s866 = scalar_lea.vmem %s1, 256
        %v867 = vld [vmem:[%s866] sm:$0xff]
        %v868 = vld [vmem:[%s866 + $0x8] sm:$0xff]
        %v869 = vld [vmem:[%s866 + $0x10] sm:$0xff]
        %v870 = vld [vmem:[%s866 + $0x18] sm:$0xff]
        %v871 = vld [vmem:[%s866 + $0x20] sm:$0xff]
        %v872 = vld [vmem:[%s866 + $0x28] sm:$0xff]
        %v873 = vld [vmem:[%s866 + $0x30] sm:$0xff]
        %v874 = vld [vmem:[%s866 + $0x38] sm:$0xff]
        %v876 = vsel %vm505, %v862, 0
        %v879 = vsel %vm505, %v863, 0
        %v882 = vsel %vm505, %v864, 0
        %v885 = vsel %vm505, %v865, 0
        %887 = vmatpush.msra.mxu0 0.0
        %888 = vmatpush.msra.mxu0 0.0
        %889 = vmatpush.msra.mxu0 0.0
        %890 = vmatpush.msra.mxu0 0.0
        %891 = vmatpush.msra.mxu0 0.0
        %892 = vmatpush.msra.mxu0 0.0
        %893 = vmatpush.msra.mxu0 0.0
        %894 = vmatpush.msra.mxu0 0.0
        %895 = vmatpush.msra.mxu0 0.0
        %896 = vmatpush.msra.mxu0 0.0
        %897 = vmatpush.msra.mxu0 0.0
        %898 = vmatpush.msra.mxu0 0.0
        %899 = vmatpush.msra.mxu0 %v873
        %900 = vmatpush.msra.mxu0 %v871
        %901 = vmatpush.msra.mxu0 %v869
        %902 = vmatpush.msra.mxu0 %v867
        %903 = vmatmul.f32.gmra.mxu0 %v876
        %v904 = vpop.f32.mrf.mxu0
        %v905 = vadd.f32 0.0, %v904
        %906 = vmatmul.f32.gmra.mxu0 %v879
        %v907 = vpop.f32.mrf.mxu0
        %v908 = vadd.f32 0.0, %v907
        %909 = vmatmul.f32.gmra.mxu0 %v882
        %v910 = vpop.f32.mrf.mxu0
        %v911 = vadd.f32 0.0, %v910
        %912 = vmatmul.f32.gmra.mxu0 %v885
        %v913 = vpop.f32.mrf.mxu0
        %v914 = vadd.f32 0.0, %v913
        %915 = vdwg.mxu0
        %916 = vmatpush.msra.mxu0 0.0
        %917 = vmatpush.msra.mxu0 0.0
        %918 = vmatpush.msra.mxu0 0.0
        %919 = vmatpush.msra.mxu0 0.0
        %920 = vmatpush.msra.mxu0 0.0
        %921 = vmatpush.msra.mxu0 0.0
        %922 = vmatpush.msra.mxu0 0.0
        %923 = vmatpush.msra.mxu0 0.0
        %924 = vmatpush.msra.mxu0 0.0
        %925 = vmatpush.msra.mxu0 0.0
        %926 = vmatpush.msra.mxu0 0.0
        %927 = vmatpush.msra.mxu0 0.0
        %928 = vmatpush.msra.mxu0 %v874
        %929 = vmatpush.msra.mxu0 %v872
        %930 = vmatpush.msra.mxu0 %v870
        %931 = vmatpush.msra.mxu0 %v868
        %932 = vmatmul.f32.gmra.mxu0 %v876
        %v933 = vpop.f32.mrf.mxu0
        %v934 = vadd.f32 0.0, %v933
        %935 = vmatmul.f32.gmra.mxu0 %v879
        %v936 = vpop.f32.mrf.mxu0
        %v937 = vadd.f32 0.0, %v936
        %938 = vmatmul.f32.gmra.mxu0 %v882
        %v939 = vpop.f32.mrf.mxu0
        %v940 = vadd.f32 0.0, %v939
        %941 = vmatmul.f32.gmra.mxu0 %v885
        %v942 = vpop.f32.mrf.mxu0
        %v943 = vadd.f32 0.0, %v942
        %944 = vdwg.mxu0
        %v945 = vadd.f32 %v854, %v905
        %v946 = vadd.f32 %v855, %v934
        %v947 = vadd.f32 %v856, %v908
        %v948 = vadd.f32 %v857, %v937
        %v949 = vadd.f32 %v858, %v911
        %v950 = vadd.f32 %v859, %v940
        %v951 = vadd.f32 %v860, %v914
        %v952 = vadd.f32 %v861, %v943
        %v953 = vmul.f32 %v945, %v945
        %v954 = vmul.f32 %v946, %v946
        %v955 = vmul.f32 %v947, %v947
        %v956 = vmul.f32 %v948, %v948
        %v957 = vmul.f32 %v949, %v949
        %v958 = vmul.f32 %v950, %v950
        %v959 = vmul.f32 %v951, %v951
        %v960 = vmul.f32 %v952, %v952
        %v961 = vadd.f32 %v953, %v945
        %v962 = vadd.f32 %v954, %v946
        %v963 = vadd.f32 %v955, %v947
        %v964 = vadd.f32 %v956, %v948
        %v965 = vadd.f32 %v957, %v949
        %v966 = vadd.f32 %v958, %v950
        %v967 = vadd.f32 %v959, %v951
        %v968 = vadd.f32 %v960, %v952
        %v969 = vld [vmem:[%s3] sm:$0xff]
        %v970 = vld [vmem:[%s3 + $0x8] sm:$0x3f]
        %vm971 = vcmask 228352
        %v973 = vsel %vm971, %v969, 0
        %v976 = vsel %vm971, %v970, 0
        %vm978 = vcmask 1043456
        %v980 = vsel %vm978, %v967, 0
        %v983 = vsel %vm978, %v968, 0
        %985 = vmatpush.msra.mxu0 0.0
        %986 = vmatpush.msra.mxu0 0.0
        %987 = vmatpush.msra.mxu0 0.0
        %988 = vmatpush.msra.mxu0 0.0
        %989 = vmatpush.msra.mxu0 0.0
        %990 = vmatpush.msra.mxu0 0.0
        %991 = vmatpush.msra.mxu0 0.0
        %992 = vmatpush.msra.mxu0 0.0
        %993 = vmatpush.msra.mxu0 0.0
        %994 = vmatpush.msra.mxu0 0.0
        %995 = vmatpush.msra.mxu0 0.0
        %996 = vmatpush.msra.mxu0 0.0
        %997 = vmatpush.msra.mxu0 %v980
        %998 = vmatpush.msra.mxu0 %v965
        %999 = vmatpush.msra.mxu0 %v963
        %1000 = vmatpush.msra.mxu0 %v961
        %1001 = vmatmul.f32.gmra.mxu0 %v973
        %v1002 = vpop.f32.mrf.mxu0
        %v1003 = vadd.f32 0.0, %v1002
        %1004 = vmatmul.f32.gmra.mxu0 %v976
        %v1005 = vpop.f32.mrf.mxu0
        %v1006 = vadd.f32 0.0, %v1005
        %1007 = vdwg.mxu0
        %1008 = vmatpush.msra.mxu0 0.0
        %1009 = vmatpush.msra.mxu0 0.0
        %1010 = vmatpush.msra.mxu0 0.0
        %1011 = vmatpush.msra.mxu0 0.0
        %1012 = vmatpush.msra.mxu0 0.0
        %1013 = vmatpush.msra.mxu0 0.0
        %1014 = vmatpush.msra.mxu0 0.0
        %1015 = vmatpush.msra.mxu0 0.0
        %1016 = vmatpush.msra.mxu0 0.0
        %1017 = vmatpush.msra.mxu0 0.0
        %1018 = vmatpush.msra.mxu0 0.0
        %1019 = vmatpush.msra.mxu0 0.0
        %1020 = vmatpush.msra.mxu0 %v983
        %1021 = vmatpush.msra.mxu0 %v966
        %1022 = vmatpush.msra.mxu0 %v964
        %1023 = vmatpush.msra.mxu0 %v962
        %1024 = vmatmul.f32.gmra.mxu0 %v973
        %v1025 = vpop.f32.mrf.mxu0
        %v1026 = vadd.f32 0.0, %v1025
        %1027 = vmatmul.f32.gmra.mxu0 %v976
        %v1028 = vpop.f32.mrf.mxu0
        %v1029 = vadd.f32 0.0, %v1028
        %1030 = vdwg.mxu0
        %v1031 = vld [vmem:[%s4] sm:$0xff]
        %v1032 = vld [vmem:[%s4 + $0x8] sm:$0xff]
        %v1033 = vld [vmem:[%s4 + $0x10] sm:$0xff]
        %v1034 = vld [vmem:[%s4 + $0x18] sm:$0xff]
        %v1035 = vld [vmem:[%s4 + $0x20] sm:$0xff]
        %v1036 = vld [vmem:[%s4 + $0x28] sm:$0xff]
        %v1037 = vld [vmem:[%s4 + $0x30] sm:$0xff]
        %v1038 = vld [vmem:[%s4 + $0x38] sm:$0xff]
        %v1039 = vld [vmem:[%s4 + $0x40] sm:$0xff]
        %v1040 = vld [vmem:[%s4 + $0x48] sm:$0xff]
        %v1041 = vld [vmem:[%s4 + $0x50] sm:$0xff]
        %v1042 = vld [vmem:[%s4 + $0x58] sm:$0xff]
        %v1043 = vld [vmem:[%s4 + $0x60] sm:$0xff]
        %v1044 = vld [vmem:[%s4 + $0x68] sm:$0xff]
        %v1045 = vld [vmem:[%s4 + $0x70] sm:$0xff]
        %v1046 = vld [vmem:[%s4 + $0x78] sm:$0xff]
        %v1047 = vld [vmem:[%s4 + $0x80] sm:$0xff]
        %v1048 = vld [vmem:[%s4 + $0x88] sm:$0xff]
        %v1049 = vld [vmem:[%s4 + $0x90] sm:$0xff]
        %v1050 = vld [vmem:[%s4 + $0x98] sm:$0xff]
        %v1051 = vld [vmem:[%s4 + $0xa0] sm:$0xff]
        %vm1052 = vcmask 326656
        %v1054 = vsel %vm1052, %v1026, 0
        %v1057 = vsel %vm1052, %v1029, 0
        %1059 = vmatpush.msra.mxu0 %v1046
        %1060 = vmatpush.msra.mxu0 %v1045
        %1061 = vmatpush.msra.mxu0 %v1044
        %1062 = vmatpush.msra.mxu0 %v1043
        %1063 = vmatpush.msra.mxu0 %v1042
        %1064 = vmatpush.msra.mxu0 %v1041
        %1065 = vmatpush.msra.mxu0 %v1040
        %1066 = vmatpush.msra.mxu0 %v1039
        %1067 = vmatpush.msra.mxu0 %v1038
        %1068 = vmatpush.msra.mxu0 %v1037
        %1069 = vmatpush.msra.mxu0 %v1036
        %1070 = vmatpush.msra.mxu0 %v1035
        %1071 = vmatpush.msra.mxu0 %v1034
        %1072 = vmatpush.msra.mxu0 %v1033
        %1073 = vmatpush.msra.mxu0 %v1032
        %1074 = vmatpush.msra.mxu0 %v1031
        %1075 = vmatmul.f32.gmra.mxu0 %v1003
        %v1076 = vpop.f32.mrf.mxu0
        %v1077 = vadd.f32 0.0, %v1076
        %1078 = vmatmul.f32.gmra.mxu0 %v1006
        %v1079 = vpop.f32.mrf.mxu0
        %v1080 = vadd.f32 0.0, %v1079
        %1081 = vdwg.mxu0
        %1082 = vmatpush.msra.mxu0 0.0
        %1083 = vmatpush.msra.mxu0 0.0
        %1084 = vmatpush.msra.mxu0 0.0
        %1085 = vmatpush.msra.mxu0 0.0
        %1086 = vmatpush.msra.mxu0 0.0
        %1087 = vmatpush.msra.mxu0 0.0
        %1088 = vmatpush.msra.mxu0 0.0
        %1089 = vmatpush.msra.mxu0 0.0
        %1090 = vmatpush.msra.mxu0 0.0
        %1091 = vmatpush.msra.mxu0 0.0
        %1092 = vmatpush.msra.mxu0 0.0
        %1093 = vmatpush.msra.mxu0 %v1051
        %1094 = vmatpush.msra.mxu0 %v1050
        %1095 = vmatpush.msra.mxu0 %v1049
        %1096 = vmatpush.msra.mxu0 %v1048
        %1097 = vmatpush.msra.mxu0 %v1047
        %1098 = vmatmul.f32.gmra.mxu0 %v1054
        %v1099 = vpop.f32.mrf.mxu0
        %v1100 = vadd.f32 %v1077, %v1099
        %1101 = vmatmul.f32.gmra.mxu0 %v1057
        %v1102 = vpop.f32.mrf.mxu0
        %v1103 = vadd.f32 %v1080, %v1102
        %1104 = vdwg.mxu0
        %v1105 = vmul.f32 %v1100, 0.25
        %v1106 = vmul.f32 %v1103, 0.25
        %vm1107 = vcmask 687104
        %1108 = vst.msk [vmem:[#allocation2] sm:$0xff] %vm1107, %v1105
        %vm1109 = vcmask 685056
        %1110 = vst.msk [vmem:[#allocation2 + $0x8] sm:$0x3f] %vm1109, %v1106
        %v1111 = vld [vmem:[%s6] sm:$0x3]
        %v1112 = vld [vmem:[#allocation2] sm:$0xff]
        %v1113 = vld [vmem:[#allocation2 + $0x8] sm:$0x3]
        %v1114 = vld [vmem:[%s5] sm:$0xff]
        %v1115 = vld [vmem:[%s5 + $0x8] sm:$0xff]
        %v1116 = vld [vmem:[%s5 + $0x10] sm:$0xff]
        %v1117 = vld [vmem:[%s5 + $0x18] sm:$0xff]
        %v1118 = vld [vmem:[%s5 + $0x20] sm:$0xff]
        %v1119 = vld [vmem:[%s5 + $0x28] sm:$0xff]
        %v1120 = vld [vmem:[%s5 + $0x30] sm:$0xff]
        %v1121 = vld [vmem:[%s5 + $0x38] sm:$0xff]
        %v1122 = vld [vmem:[%s5 + $0x40] sm:$0xff]
        %v1123 = vld [vmem:[%s5 + $0x48] sm:$0xff]
        %v1124 = vld [vmem:[%s5 + $0x50] sm:$0xff]
        %v1125 = vld [vmem:[%s5 + $0x58] sm:$0xff]
        %v1126 = vld [vmem:[%s5 + $0x60] sm:$0xff]
        %v1127 = vld [vmem:[%s5 + $0x68] sm:$0xff]
        %v1128 = vld [vmem:[%s5 + $0x70] sm:$0xff]
        %v1129 = vld [vmem:[%s5 + $0x78] sm:$0xff]
        %v1130 = vld [vmem:[%s5 + $0x80] sm:$0xff]
        %v1131 = vld [vmem:[%s5 + $0x88] sm:$0xff]
        %v1132 = vld [vmem:[%s5 + $0x90] sm:$0xff]
        %v1133 = vld [vmem:[%s5 + $0x98] sm:$0xff]
        %v1134 = vld [vmem:[%s5 + $0xa0] sm:$0xf]
        %v1135 = vld [vmem:[%s5 + $0xa8] sm:$0xf]
        %v1137 = vsel %vm1107, %v1112, 0
        %v1140 = vsel %vm1107, %v1113, 0
        %v1143 = vsel %vm978, %v1134, 0
        %v1146 = vsel %vm978, %v1135, 0
        %1148 = vmatpush.msra.mxu0 0.0
        %1149 = vmatpush.msra.mxu0 0.0
        %1150 = vmatpush.msra.mxu0 0.0
        %1151 = vmatpush.msra.mxu0 0.0
        %1152 = vmatpush.msra.mxu0 0.0
        %1153 = vmatpush.msra.mxu0 %v1143
        %1154 = vmatpush.msra.mxu0 %v1132
        %1155 = vmatpush.msra.mxu0 %v1130
        %1156 = vmatpush.msra.mxu0 %v1128
        %1157 = vmatpush.msra.mxu0 %v1126
        %1158 = vmatpush.msra.mxu0 %v1124
        %1159 = vmatpush.msra.mxu0 %v1122
        %1160 = vmatpush.msra.mxu0 %v1120
        %1161 = vmatpush.msra.mxu0 %v1118
        %1162 = vmatpush.msra.mxu0 %v1116
        %1163 = vmatpush.msra.mxu0 %v1114
        %1164 = vmatmul.f32.gmra.mxu0 %v1137
        %v1165 = vpop.f32.mrf.mxu0
        %v1166 = vadd.f32 0.0, %v1165
        %1167 = vmatmul.f32.gmra.mxu0 %v1140
        %v1168 = vpop.f32.mrf.mxu0
        %v1169 = vadd.f32 0.0, %v1168
        %1170 = vdwg.mxu0
        %1171 = vmatpush.msra.mxu0 0.0
        %1172 = vmatpush.msra.mxu0 0.0
        %1173 = vmatpush.msra.mxu0 0.0
        %1174 = vmatpush.msra.mxu0 0.0
        %1175 = vmatpush.msra.mxu0 0.0
        %1176 = vmatpush.msra.mxu0 %v1146
        %1177 = vmatpush.msra.mxu0 %v1133
        %1178 = vmatpush.msra.mxu0 %v1131
        %1179 = vmatpush.msra.mxu0 %v1129
        %1180 = vmatpush.msra.mxu0 %v1127
        %1181 = vmatpush.msra.mxu0 %v1125
        %1182 = vmatpush.msra.mxu0 %v1123
        %1183 = vmatpush.msra.mxu0 %v1121
        %1184 = vmatpush.msra.mxu0 %v1119
        %1185 = vmatpush.msra.mxu0 %v1117
        %1186 = vmatpush.msra.mxu0 %v1115
        %1187 = vmatmul.f32.gmra.mxu0 %v1137
        %v1188 = vpop.f32.mrf.mxu0
        %v1189 = vadd.f32 0.0, %v1188
        %1190 = vmatmul.f32.gmra.mxu0 %v1140
        %v1191 = vpop.f32.mrf.mxu0
        %v1192 = vadd.f32 0.0, %v1191
        %1193 = vdwg.mxu0
        %v1195 = vperm.slane %v1111, 0
        %v1196 = vperm.slane %v1111, 1
        %v1199 = vadd.f32 %v1195, %v1166
        %v1200 = vadd.f32 %v1196, %v1189
        %v1201 = vadd.f32 %v1195, %v1169
        %v1202 = vadd.f32 %v1196, %v1192
        %v1203 = vld [vmem:[#allocation2 + $0x1] sm:$0xff]
        %v1204 = vld [vmem:[#allocation2 + $0x9] sm:$0x3]
        %s1205 = scalar_lea.vmem %s5, 176
        %v1206 = vld [vmem:[%s1205] sm:$0xff]
        %v1207 = vld [vmem:[%s1205 + $0x8] sm:$0xff]
        %v1208 = vld [vmem:[%s1205 + $0x10] sm:$0xff]
        %v1209 = vld [vmem:[%s1205 + $0x18] sm:$0xff]
        %v1210 = vld [vmem:[%s1205 + $0x20] sm:$0xff]
        %v1211 = vld [vmem:[%s1205 + $0x28] sm:$0xff]
        %v1212 = vld [vmem:[%s1205 + $0x30] sm:$0xff]
        %v1213 = vld [vmem:[%s1205 + $0x38] sm:$0xff]
        %v1214 = vld [vmem:[%s1205 + $0x40] sm:$0xff]
        %v1215 = vld [vmem:[%s1205 + $0x48] sm:$0xff]
        %v1216 = vld [vmem:[%s1205 + $0x50] sm:$0xff]
        %v1217 = vld [vmem:[%s1205 + $0x58] sm:$0xff]
        %v1218 = vld [vmem:[%s1205 + $0x60] sm:$0xff]
        %v1219 = vld [vmem:[%s1205 + $0x68] sm:$0xff]
        %v1220 = vld [vmem:[%s1205 + $0x70] sm:$0xff]
        %v1221 = vld [vmem:[%s1205 + $0x78] sm:$0xff]
        %v1222 = vld [vmem:[%s1205 + $0x80] sm:$0xff]
        %v1223 = vld [vmem:[%s1205 + $0x88] sm:$0xff]
        %v1224 = vld [vmem:[%s1205 + $0x90] sm:$0xff]
        %v1225 = vld [vmem:[%s1205 + $0x98] sm:$0xff]
        %v1226 = vld [vmem:[%s1205 + $0xa0] sm:$0xf]
        %v1227 = vld [vmem:[%s1205 + $0xa8] sm:$0xf]
        %v1229 = vsel %vm1107, %v1203, 0
        %v1232 = vsel %vm1107, %v1204, 0
        %v1235 = vsel %vm978, %v1226, 0
        %v1238 = vsel %vm978, %v1227, 0
        %1240 = vmatpush.msra.mxu0 0.0
        %1241 = vmatpush.msra.mxu0 0.0
        %1242 = vmatpush.msra.mxu0 0.0
        %1243 = vmatpush.msra.mxu0 0.0
        %1244 = vmatpush.msra.mxu0 0.0
        %1245 = vmatpush.msra.mxu0 %v1235
        %1246 = vmatpush.msra.mxu0 %v1224
        %1247 = vmatpush.msra.mxu0 %v1222
        %1248 = vmatpush.msra.mxu0 %v1220
        %1249 = vmatpush.msra.mxu0 %v1218
        %1250 = vmatpush.msra.mxu0 %v1216
        %1251 = vmatpush.msra.mxu0 %v1214
        %1252 = vmatpush.msra.mxu0 %v1212
        %1253 = vmatpush.msra.mxu0 %v1210
        %1254 = vmatpush.msra.mxu0 %v1208
        %1255 = vmatpush.msra.mxu0 %v1206
        %1256 = vmatmul.f32.gmra.mxu0 %v1229
        %v1257 = vpop.f32.mrf.mxu0
        %v1258 = vadd.f32 0.0, %v1257
        %1259 = vmatmul.f32.gmra.mxu0 %v1232
        %v1260 = vpop.f32.mrf.mxu0
        %v1261 = vadd.f32 0.0, %v1260
        %1262 = vdwg.mxu0
        %1263 = vmatpush.msra.mxu0 0.0
        %1264 = vmatpush.msra.mxu0 0.0
        %1265 = vmatpush.msra.mxu0 0.0
        %1266 = vmatpush.msra.mxu0 0.0
        %1267 = vmatpush.msra.mxu0 0.0
        %1268 = vmatpush.msra.mxu0 %v1238
        %1269 = vmatpush.msra.mxu0 %v1225
        %1270 = vmatpush.msra.mxu0 %v1223
        %1271 = vmatpush.msra.mxu0 %v1221
        %1272 = vmatpush.msra.mxu0 %v1219
        %1273 = vmatpush.msra.mxu0 %v1217
        %1274 = vmatpush.msra.mxu0 %v1215
        %1275 = vmatpush.msra.mxu0 %v1213
        %1276 = vmatpush.msra.mxu0 %v1211
        %1277 = vmatpush.msra.mxu0 %v1209
        %1278 = vmatpush.msra.mxu0 %v1207
        %1279 = vmatmul.f32.gmra.mxu0 %v1229
        %v1280 = vpop.f32.mrf.mxu0
        %v1281 = vadd.f32 0.0, %v1280
        %1282 = vmatmul.f32.gmra.mxu0 %v1232
        %v1283 = vpop.f32.mrf.mxu0
        %v1284 = vadd.f32 0.0, %v1283
        %1285 = vdwg.mxu0
        %v1286 = vadd.f32 %v1199, %v1258
        %v1287 = vadd.f32 %v1200, %v1281
        %v1288 = vadd.f32 %v1201, %v1261
        %v1289 = vadd.f32 %v1202, %v1284
        %v1290 = vld [vmem:[#allocation2 + $0x2] sm:$0xff]
        %v1291 = vld [vmem:[#allocation2 + $0xa] sm:$0x3]
        %s1292 = scalar_lea.vmem %s5, 352
        %v1293 = vld [vmem:[%s1292] sm:$0xff]
        %v1294 = vld [vmem:[%s1292 + $0x8] sm:$0xff]
        %v1295 = vld [vmem:[%s1292 + $0x10] sm:$0xff]
        %v1296 = vld [vmem:[%s1292 + $0x18] sm:$0xff]
        %v1297 = vld [vmem:[%s1292 + $0x20] sm:$0xff]
        %v1298 = vld [vmem:[%s1292 + $0x28] sm:$0xff]
        %v1299 = vld [vmem:[%s1292 + $0x30] sm:$0xff]
        %v1300 = vld [vmem:[%s1292 + $0x38] sm:$0xff]
        %v1301 = vld [vmem:[%s1292 + $0x40] sm:$0xff]
        %v1302 = vld [vmem:[%s1292 + $0x48] sm:$0xff]
        %v1303 = vld [vmem:[%s1292 + $0x50] sm:$0xff]
        %v1304 = vld [vmem:[%s1292 + $0x58] sm:$0xff]
        %v1305 = vld [vmem:[%s1292 + $0x60] sm:$0xff]
        %v1306 = vld [vmem:[%s1292 + $0x68] sm:$0xff]
        %v1307 = vld [vmem:[%s1292 + $0x70] sm:$0xff]
        %v1308 = vld [vmem:[%s1292 + $0x78] sm:$0xff]
        %v1309 = vld [vmem:[%s1292 + $0x80] sm:$0xff]
        %v1310 = vld [vmem:[%s1292 + $0x88] sm:$0xff]
        %v1311 = vld [vmem:[%s1292 + $0x90] sm:$0xff]
        %v1312 = vld [vmem:[%s1292 + $0x98] sm:$0xff]
        %v1313 = vld [vmem:[%s1292 + $0xa0] sm:$0xf]
        %v1314 = vld [vmem:[%s1292 + $0xa8] sm:$0xf]
        %v1316 = vsel %vm1107, %v1290, 0
        %v1319 = vsel %vm1107, %v1291, 0
        %v1322 = vsel %vm978, %v1313, 0
        %v1325 = vsel %vm978, %v1314, 0
        %1327 = vmatpush.msra.mxu0 0.0
        %1328 = vmatpush.msra.mxu0 0.0
        %1329 = vmatpush.msra.mxu0 0.0
        %1330 = vmatpush.msra.mxu0 0.0
        %1331 = vmatpush.msra.mxu0 0.0
        %1332 = vmatpush.msra.mxu0 %v1322
        %1333 = vmatpush.msra.mxu0 %v1311
        %1334 = vmatpush.msra.mxu0 %v1309
        %1335 = vmatpush.msra.mxu0 %v1307
        %1336 = vmatpush.msra.mxu0 %v1305
        %1337 = vmatpush.msra.mxu0 %v1303
        %1338 = vmatpush.msra.mxu0 %v1301
        %1339 = vmatpush.msra.mxu0 %v1299
        %1340 = vmatpush.msra.mxu0 %v1297
        %1341 = vmatpush.msra.mxu0 %v1295
        %1342 = vmatpush.msra.mxu0 %v1293
        %1343 = vmatmul.f32.gmra.mxu0 %v1316
        %v1344 = vpop.f32.mrf.mxu0
        %v1345 = vadd.f32 0.0, %v1344
        %1346 = vmatmul.f32.gmra.mxu0 %v1319
        %v1347 = vpop.f32.mrf.mxu0
        %v1348 = vadd.f32 0.0, %v1347
        %1349 = vdwg.mxu0
        %1350 = vmatpush.msra.mxu0 0.0
        %1351 = vmatpush.msra.mxu0 0.0
        %1352 = vmatpush.msra.mxu0 0.0
        %1353 = vmatpush.msra.mxu0 0.0
        %1354 = vmatpush.msra.mxu0 0.0
        %1355 = vmatpush.msra.mxu0 %v1325
        %1356 = vmatpush.msra.mxu0 %v1312
        %1357 = vmatpush.msra.mxu0 %v1310
        %1358 = vmatpush.msra.mxu0 %v1308
        %1359 = vmatpush.msra.mxu0 %v1306
        %1360 = vmatpush.msra.mxu0 %v1304
        %1361 = vmatpush.msra.mxu0 %v1302
        %1362 = vmatpush.msra.mxu0 %v1300
        %1363 = vmatpush.msra.mxu0 %v1298
        %1364 = vmatpush.msra.mxu0 %v1296
        %1365 = vmatpush.msra.mxu0 %v1294
        %1366 = vmatmul.f32.gmra.mxu0 %v1316
        %v1367 = vpop.f32.mrf.mxu0
        %v1368 = vadd.f32 0.0, %v1367
        %1369 = vmatmul.f32.gmra.mxu0 %v1319
        %v1370 = vpop.f32.mrf.mxu0
        %v1371 = vadd.f32 0.0, %v1370
        %1372 = vdwg.mxu0
        %v1373 = vadd.f32 %v1286, %v1345
        %v1374 = vadd.f32 %v1287, %v1368
        %v1375 = vadd.f32 %v1288, %v1348
        %v1376 = vadd.f32 %v1289, %v1371
        %v1377 = vld [vmem:[#allocation2 + $0x3] sm:$0xff]
        %v1378 = vld [vmem:[#allocation2 + $0xb] sm:$0x3]
        %s1379 = scalar_lea.vmem %s5, 528
        %v1380 = vld [vmem:[%s1379] sm:$0xff]
        %v1381 = vld [vmem:[%s1379 + $0x8] sm:$0xff]
        %v1382 = vld [vmem:[%s1379 + $0x10] sm:$0xff]
        %v1383 = vld [vmem:[%s1379 + $0x18] sm:$0xff]
        %v1384 = vld [vmem:[%s1379 + $0x20] sm:$0xff]
        %v1385 = vld [vmem:[%s1379 + $0x28] sm:$0xff]
        %v1386 = vld [vmem:[%s1379 + $0x30] sm:$0xff]
        %v1387 = vld [vmem:[%s1379 + $0x38] sm:$0xff]
        %v1388 = vld [vmem:[%s1379 + $0x40] sm:$0xff]
        %v1389 = vld [vmem:[%s1379 + $0x48] sm:$0xff]
        %v1390 = vld [vmem:[%s1379 + $0x50] sm:$0xff]
        %v1391 = vld [vmem:[%s1379 + $0x58] sm:$0xff]
        %v1392 = vld [vmem:[%s1379 + $0x60] sm:$0xff]
        %v1393 = vld [vmem:[%s1379 + $0x68] sm:$0xff]
        %v1394 = vld [vmem:[%s1379 + $0x70] sm:$0xff]
        %v1395 = vld [vmem:[%s1379 + $0x78] sm:$0xff]
        %v1396 = vld [vmem:[%s1379 + $0x80] sm:$0xff]
        %v1397 = vld [vmem:[%s1379 + $0x88] sm:$0xff]
        %v1398 = vld [vmem:[%s1379 + $0x90] sm:$0xff]
        %v1399 = vld [vmem:[%s1379 + $0x98] sm:$0xff]
        %v1400 = vld [vmem:[%s1379 + $0xa0] sm:$0xf]
        %v1401 = vld [vmem:[%s1379 + $0xa8] sm:$0xf]
        %v1403 = vsel %vm1107, %v1377, 0
        %v1406 = vsel %vm1107, %v1378, 0
        %v1409 = vsel %vm978, %v1400, 0
        %v1412 = vsel %vm978, %v1401, 0
        %1414 = vmatpush.msra.mxu0 0.0
        %1415 = vmatpush.msra.mxu0 0.0
        %1416 = vmatpush.msra.mxu0 0.0
        %1417 = vmatpush.msra.mxu0 0.0
        %1418 = vmatpush.msra.mxu0 0.0
        %1419 = vmatpush.msra.mxu0 %v1409
        %1420 = vmatpush.msra.mxu0 %v1398
        %1421 = vmatpush.msra.mxu0 %v1396
        %1422 = vmatpush.msra.mxu0 %v1394
        %1423 = vmatpush.msra.mxu0 %v1392
        %1424 = vmatpush.msra.mxu0 %v1390
        %1425 = vmatpush.msra.mxu0 %v1388
        %1426 = vmatpush.msra.mxu0 %v1386
        %1427 = vmatpush.msra.mxu0 %v1384
        %1428 = vmatpush.msra.mxu0 %v1382
        %1429 = vmatpush.msra.mxu0 %v1380
        %1430 = vmatmul.f32.gmra.mxu0 %v1403
        %v1431 = vpop.f32.mrf.mxu0
        %v1432 = vadd.f32 0.0, %v1431
        %1433 = vmatmul.f32.gmra.mxu0 %v1406
        %v1434 = vpop.f32.mrf.mxu0
        %v1435 = vadd.f32 0.0, %v1434
        %1436 = vdwg.mxu0
        %1437 = vmatpush.msra.mxu0 0.0
        %1438 = vmatpush.msra.mxu0 0.0
        %1439 = vmatpush.msra.mxu0 0.0
        %1440 = vmatpush.msra.mxu0 0.0
        %1441 = vmatpush.msra.mxu0 0.0
        %1442 = vmatpush.msra.mxu0 %v1412
        %1443 = vmatpush.msra.mxu0 %v1399
        %1444 = vmatpush.msra.mxu0 %v1397
        %1445 = vmatpush.msra.mxu0 %v1395
        %1446 = vmatpush.msra.mxu0 %v1393
        %1447 = vmatpush.msra.mxu0 %v1391
        %1448 = vmatpush.msra.mxu0 %v1389
        %1449 = vmatpush.msra.mxu0 %v1387
        %1450 = vmatpush.msra.mxu0 %v1385
        %1451 = vmatpush.msra.mxu0 %v1383
        %1452 = vmatpush.msra.mxu0 %v1381
        %1453 = vmatmul.f32.gmra.mxu0 %v1403
        %v1454 = vpop.f32.mrf.mxu0
        %v1455 = vadd.f32 0.0, %v1454
        %1456 = vmatmul.f32.gmra.mxu0 %v1406
        %v1457 = vpop.f32.mrf.mxu0
        %v1458 = vadd.f32 0.0, %v1457
        %1459 = vdwg.mxu0
        %v1460 = vadd.f32 %v1373, %v1432
        %v1461 = vadd.f32 %v1374, %v1455
        %v1462 = vadd.f32 %v1375, %v1435
        %v1463 = vadd.f32 %v1376, %v1458
        %v1464 = vld [vmem:[#allocation2 + $0x4] sm:$0xff]
        %v1465 = vld [vmem:[#allocation2 + $0xc] sm:$0x3]
        %s1466 = scalar_lea.vmem %s5, 704
        %v1467 = vld [vmem:[%s1466] sm:$0xff]
        %v1468 = vld [vmem:[%s1466 + $0x8] sm:$0xff]
        %v1469 = vld [vmem:[%s1466 + $0x10] sm:$0xff]
        %v1470 = vld [vmem:[%s1466 + $0x18] sm:$0xff]
        %v1471 = vld [vmem:[%s1466 + $0x20] sm:$0xff]
        %v1472 = vld [vmem:[%s1466 + $0x28] sm:$0xff]
        %v1473 = vld [vmem:[%s1466 + $0x30] sm:$0xff]
        %v1474 = vld [vmem:[%s1466 + $0x38] sm:$0xff]
        %v1475 = vld [vmem:[%s1466 + $0x40] sm:$0xff]
        %v1476 = vld [vmem:[%s1466 + $0x48] sm:$0xff]
        %v1477 = vld [vmem:[%s1466 + $0x50] sm:$0xff]
        %v1478 = vld [vmem:[%s1466 + $0x58] sm:$0xff]
        %v1479 = vld [vmem:[%s1466 + $0x60] sm:$0xff]
        %v1480 = vld [vmem:[%s1466 + $0x68] sm:$0xff]
        %v1481 = vld [vmem:[%s1466 + $0x70] sm:$0xff]
        %v1482 = vld [vmem:[%s1466 + $0x78] sm:$0xff]
        %v1483 = vld [vmem:[%s1466 + $0x80] sm:$0xff]
        %v1484 = vld [vmem:[%s1466 + $0x88] sm:$0xff]
        %v1485 = vld [vmem:[%s1466 + $0x90] sm:$0xff]
        %v1486 = vld [vmem:[%s1466 + $0x98] sm:$0xff]
        %v1487 = vld [vmem:[%s1466 + $0xa0] sm:$0xf]
        %v1488 = vld [vmem:[%s1466 + $0xa8] sm:$0xf]
        %v1490 = vsel %vm1107, %v1464, 0
        %v1493 = vsel %vm1107, %v1465, 0
        %v1496 = vsel %vm978, %v1487, 0
        %v1499 = vsel %vm978, %v1488, 0
        %1501 = vmatpush.msra.mxu0 0.0
        %1502 = vmatpush.msra.mxu0 0.0
        %1503 = vmatpush.msra.mxu0 0.0
        %1504 = vmatpush.msra.mxu0 0.0
        %1505 = vmatpush.msra.mxu0 0.0
        %1506 = vmatpush.msra.mxu0 %v1496
        %1507 = vmatpush.msra.mxu0 %v1485
        %1508 = vmatpush.msra.mxu0 %v1483
        %1509 = vmatpush.msra.mxu0 %v1481
        %1510 = vmatpush.msra.mxu0 %v1479
        %1511 = vmatpush.msra.mxu0 %v1477
        %1512 = vmatpush.msra.mxu0 %v1475
        %1513 = vmatpush.msra.mxu0 %v1473
        %1514 = vmatpush.msra.mxu0 %v1471
        %1515 = vmatpush.msra.mxu0 %v1469
        %1516 = vmatpush.msra.mxu0 %v1467
        %1517 = vmatmul.f32.gmra.mxu0 %v1490
        %v1518 = vpop.f32.mrf.mxu0
        %v1519 = vadd.f32 0.0, %v1518
        %1520 = vmatmul.f32.gmra.mxu0 %v1493
        %v1521 = vpop.f32.mrf.mxu0
        %v1522 = vadd.f32 0.0, %v1521
        %1523 = vdwg.mxu0
        %1524 = vmatpush.msra.mxu0 0.0
        %1525 = vmatpush.msra.mxu0 0.0
        %1526 = vmatpush.msra.mxu0 0.0
        %1527 = vmatpush.msra.mxu0 0.0
        %1528 = vmatpush.msra.mxu0 0.0
        %1529 = vmatpush.msra.mxu0 %v1499
        %1530 = vmatpush.msra.mxu0 %v1486
        %1531 = vmatpush.msra.mxu0 %v1484
        %1532 = vmatpush.msra.mxu0 %v1482
        %1533 = vmatpush.msra.mxu0 %v1480
        %1534 = vmatpush.msra.mxu0 %v1478
        %1535 = vmatpush.msra.mxu0 %v1476
        %1536 = vmatpush.msra.mxu0 %v1474
        %1537 = vmatpush.msra.mxu0 %v1472
        %1538 = vmatpush.msra.mxu0 %v1470
        %1539 = vmatpush.msra.mxu0 %v1468
        %1540 = vmatmul.f32.gmra.mxu0 %v1490
        %v1541 = vpop.f32.mrf.mxu0
        %v1542 = vadd.f32 0.0, %v1541
        %1543 = vmatmul.f32.gmra.mxu0 %v1493
        %v1544 = vpop.f32.mrf.mxu0
        %v1545 = vadd.f32 0.0, %v1544
        %1546 = vdwg.mxu0
        %v1547 = vadd.f32 %v1460, %v1519
        %v1548 = vadd.f32 %v1461, %v1542
        %v1549 = vadd.f32 %v1462, %v1522
        %v1550 = vadd.f32 %v1463, %v1545
        %v1551 = vmul.f32 %v1547, %v1547
        %v1552 = vmul.f32 %v1548, %v1548
        %v1553 = vmul.f32 %v1549, %v1549
        %v1554 = vmul.f32 %v1550, %v1550
        %v1555 = vadd.f32 %v1551, %v1547
        %v1556 = vadd.f32 %v1552, %v1548
        %v1557 = vadd.f32 %v1553, %v1549
        %v1558 = vadd.f32 %v1554, %v1550
        %v1559 = vld [vmem:[%s7] sm:$0x1f]
        %vm1560 = vcmask 80896
        %v1562 = vsel %vm1560, %v1559, 0
        %vm1564 = vcmask 1041408
        %v1566 = vsel %vm1564, %v1557, 0
        %v1569 = vsel %vm1564, %v1558, 0
        %1571 = vmatpush.msra.mxu0 0.0
        %1572 = vmatpush.msra.mxu0 0.0
        %1573 = vmatpush.msra.mxu0 0.0
        %1574 = vmatpush.msra.mxu0 0.0
        %1575 = vmatpush.msra.mxu0 0.0
        %1576 = vmatpush.msra.mxu0 0.0
        %1577 = vmatpush.msra.mxu0 0.0
        %1578 = vmatpush.msra.mxu0 0.0
        %1579 = vmatpush.msra.mxu0 0.0
        %1580 = vmatpush.msra.mxu0 0.0
        %1581 = vmatpush.msra.mxu0 0.0
        %1582 = vmatpush.msra.mxu0 0.0
        %1583 = vmatpush.msra.mxu0 0.0
        %1584 = vmatpush.msra.mxu0 0.0
        %1585 = vmatpush.msra.mxu0 %v1566
        %1586 = vmatpush.msra.mxu0 %v1555
        %1587 = vmatmul.f32.gmra.mxu0 %v1562
        %v1588 = vpop.f32.mrf.mxu0
        %v1589 = vadd.f32 0.0, %v1588
        %1590 = vdwg.mxu0
        %1591 = vmatpush.msra.mxu0 0.0
        %1592 = vmatpush.msra.mxu0 0.0
        %1593 = vmatpush.msra.mxu0 0.0
        %1594 = vmatpush.msra.mxu0 0.0
        %1595 = vmatpush.msra.mxu0 0.0
        %1596 = vmatpush.msra.mxu0 0.0
        %1597 = vmatpush.msra.mxu0 0.0
        %1598 = vmatpush.msra.mxu0 0.0
        %1599 = vmatpush.msra.mxu0 0.0
        %1600 = vmatpush.msra.mxu0 0.0
        %1601 = vmatpush.msra.mxu0 0.0
        %1602 = vmatpush.msra.mxu0 0.0
        %1603 = vmatpush.msra.mxu0 0.0
        %1604 = vmatpush.msra.mxu0 0.0
        %1605 = vmatpush.msra.mxu0 %v1569
        %1606 = vmatpush.msra.mxu0 %v1556
        %1607 = vmatmul.f32.gmra.mxu0 %v1562
        %v1608 = vpop.f32.mrf.mxu0
        %v1609 = vadd.f32 0.0, %v1608
        %1610 = vdwg.mxu0
        %v1611 = vld [vmem:[%s8] sm:$0xff]
        %v1612 = vld [vmem:[%s8 + $0x8] sm:$0xff]
        %v1613 = vld [vmem:[%s8 + $0x10] sm:$0xff]
        %v1614 = vld [vmem:[%s8 + $0x18] sm:$0xff]
        %v1615 = vld [vmem:[%s8 + $0x20] sm:$0xff]
        %v1616 = vld [vmem:[%s8 + $0x28] sm:$0xff]
        %v1617 = vld [vmem:[%s8 + $0x30] sm:$0xff]
        %v1618 = vld [vmem:[%s8 + $0x38] sm:$0xff]
        %v1619 = vld [vmem:[%s8 + $0x40] sm:$0xff]
        %v1620 = vld [vmem:[%s8 + $0x48] sm:$0xff]
        %v1621 = vld [vmem:[%s8 + $0x50] sm:$0xff]
        %v1622 = vld [vmem:[%s8 + $0x58] sm:$0xff]
        %v1623 = vld [vmem:[%s8 + $0x60] sm:$0xff]
        %v1624 = vld [vmem:[%s8 + $0x68] sm:$0xff]
        %v1625 = vld [vmem:[%s8 + $0x70] sm:$0xff]
        %v1626 = vld [vmem:[%s8 + $0x78] sm:$0xff]
        %v1627 = vld [vmem:[%s8 + $0x80] sm:$0xff]
        %v1628 = vld [vmem:[%s8 + $0x88] sm:$0xff]
        %v1629 = vld [vmem:[%s8 + $0x90] sm:$0xff]
        %v1630 = vld [vmem:[%s8 + $0x98] sm:$0xff]
        %v1632 = vsel %vm505, %v1609, 0
        %1634 = vmatpush.msra.mxu0 %v1626
        %1635 = vmatpush.msra.mxu0 %v1625
        %1636 = vmatpush.msra.mxu0 %v1624
        %1637 = vmatpush.msra.mxu0 %v1623
        %1638 = vmatpush.msra.mxu0 %v1622
        %1639 = vmatpush.msra.mxu0 %v1621
        %1640 = vmatpush.msra.mxu0 %v1620
        %1641 = vmatpush.msra.mxu0 %v1619
        %1642 = vmatpush.msra.mxu0 %v1618
        %1643 = vmatpush.msra.mxu0 %v1617
        %1644 = vmatpush.msra.mxu0 %v1616
        %1645 = vmatpush.msra.mxu0 %v1615
        %1646 = vmatpush.msra.mxu0 %v1614
        %1647 = vmatpush.msra.mxu0 %v1613
        %1648 = vmatpush.msra.mxu0 %v1612
        %1649 = vmatpush.msra.mxu0 %v1611
        %1650 = vmatmul.f32.gmra.mxu0 %v1589
        %v1651 = vpop.f32.mrf.mxu0
        %v1652 = vadd.f32 0.0, %v1651
        %1653 = vdwg.mxu0
        %1654 = vmatpush.msra.mxu0 0.0
        %1655 = vmatpush.msra.mxu0 0.0
        %1656 = vmatpush.msra.mxu0 0.0
        %1657 = vmatpush.msra.mxu0 0.0
        %1658 = vmatpush.msra.mxu0 0.0
        %1659 = vmatpush.msra.mxu0 0.0
        %1660 = vmatpush.msra.mxu0 0.0
        %1661 = vmatpush.msra.mxu0 0.0
        %1662 = vmatpush.msra.mxu0 0.0
        %1663 = vmatpush.msra.mxu0 0.0
        %1664 = vmatpush.msra.mxu0 0.0
        %1665 = vmatpush.msra.mxu0 0.0
        %1666 = vmatpush.msra.mxu0 %v1630
        %1667 = vmatpush.msra.mxu0 %v1629
        %1668 = vmatpush.msra.mxu0 %v1628
        %1669 = vmatpush.msra.mxu0 %v1627
        %1670 = vmatmul.f32.gmra.mxu0 %v1632
        %v1671 = vpop.f32.mrf.mxu0
        %v1672 = vadd.f32 %v1652, %v1671
        %1673 = vdwg.mxu0
        %v1674 = vmul.f32 %v1672, 0.25
        %vm1675 = vcmask 651264
        %1676 = vst.msk [vmem:[#allocation3] sm:$0x1f] %vm1675, %v1674
        %v1677 = vld [vmem:[%s10] sm:$0x1]
        %v1678 = vld [vmem:[#allocation3] sm:$0x1]
        %v1679 = vld [vmem:[%s9] sm:$0xff]
        %v1680 = vld [vmem:[%s9 + $0x8] sm:$0xff]
        %v1681 = vld [vmem:[%s9 + $0x10] sm:$0xff]
        %v1682 = vld [vmem:[%s9 + $0x18] sm:$0xff]
        %v1683 = vld [vmem:[%s9 + $0x20] sm:$0xff]
        %v1684 = vld [vmem:[%s9 + $0x28] sm:$0xff]
        %v1685 = vld [vmem:[%s9 + $0x30] sm:$0xff]
        %v1686 = vld [vmem:[%s9 + $0x38] sm:$0xff]
        %v1687 = vld [vmem:[%s9 + $0x40] sm:$0xff]
        %v1688 = vld [vmem:[%s9 + $0x48] sm:$0xff]
        %vm1689 = vcmask 654336
        %v1691 = vsel %vm1689, %v1678, 0
        %1693 = vmatpush.msra.mxu0 0.0
        %1694 = vmatpush.msra.mxu0 0.0
        %1695 = vmatpush.msra.mxu0 0.0
        %1696 = vmatpush.msra.mxu0 0.0
        %1697 = vmatpush.msra.mxu0 0.0
        %1698 = vmatpush.msra.mxu0 0.0
        %1699 = vmatpush.msra.mxu0 %v1688
        %1700 = vmatpush.msra.mxu0 %v1687
        %1701 = vmatpush.msra.mxu0 %v1686
        %1702 = vmatpush.msra.mxu0 %v1685
        %1703 = vmatpush.msra.mxu0 %v1684
        %1704 = vmatpush.msra.mxu0 %v1683
        %1705 = vmatpush.msra.mxu0 %v1682
        %1706 = vmatpush.msra.mxu0 %v1681
        %1707 = vmatpush.msra.mxu0 %v1680
        %1708 = vmatpush.msra.mxu0 %v1679
        %1709 = vmatmul.f32.gmra.mxu0 %v1691
        %v1710 = vpop.f32.mrf.mxu0
        %v1711 = vadd.f32 0.0, %v1710
        %1712 = vdwg.mxu0
        %v1713 = vadd.f32 %v1677, %v1711
        %v1714 = vld [vmem:[#allocation3 + $0x1] sm:$0x1]
        %s1715 = scalar_lea.vmem %s9, 80
        %v1716 = vld [vmem:[%s1715] sm:$0xff]
        %v1717 = vld [vmem:[%s1715 + $0x8] sm:$0xff]
        %v1718 = vld [vmem:[%s1715 + $0x10] sm:$0xff]
        %v1719 = vld [vmem:[%s1715 + $0x18] sm:$0xff]
        %v1720 = vld [vmem:[%s1715 + $0x20] sm:$0xff]
        %v1721 = vld [vmem:[%s1715 + $0x28] sm:$0xff]
        %v1722 = vld [vmem:[%s1715 + $0x30] sm:$0xff]
        %v1723 = vld [vmem:[%s1715 + $0x38] sm:$0xff]
        %v1724 = vld [vmem:[%s1715 + $0x40] sm:$0xff]
        %v1725 = vld [vmem:[%s1715 + $0x48] sm:$0xff]
        %v1727 = vsel %vm1689, %v1714, 0
        %1729 = vmatpush.msra.mxu0 0.0
        %1730 = vmatpush.msra.mxu0 0.0
        %1731 = vmatpush.msra.mxu0 0.0
        %1732 = vmatpush.msra.mxu0 0.0
        %1733 = vmatpush.msra.mxu0 0.0
        %1734 = vmatpush.msra.mxu0 0.0
        %1735 = vmatpush.msra.mxu0 %v1725
        %1736 = vmatpush.msra.mxu0 %v1724
        %1737 = vmatpush.msra.mxu0 %v1723
        %1738 = vmatpush.msra.mxu0 %v1722
        %1739 = vmatpush.msra.mxu0 %v1721
        %1740 = vmatpush.msra.mxu0 %v1720
        %1741 = vmatpush.msra.mxu0 %v1719
        %1742 = vmatpush.msra.mxu0 %v1718
        %1743 = vmatpush.msra.mxu0 %v1717
        %1744 = vmatpush.msra.mxu0 %v1716
        %1745 = vmatmul.f32.gmra.mxu0 %v1727
        %v1746 = vpop.f32.mrf.mxu0
        %v1747 = vadd.f32 0.0, %v1746
        %1748 = vdwg.mxu0
        %v1749 = vadd.f32 %v1713, %v1747
        %v1750 = vld [vmem:[#allocation3 + $0x2] sm:$0x1]
        %s1751 = scalar_lea.vmem %s9, 160
        %v1752 = vld [vmem:[%s1751] sm:$0xff]
        %v1753 = vld [vmem:[%s1751 + $0x8] sm:$0xff]
        %v1754 = vld [vmem:[%s1751 + $0x10] sm:$0xff]
        %v1755 = vld [vmem:[%s1751 + $0x18] sm:$0xff]
        %v1756 = vld [vmem:[%s1751 + $0x20] sm:$0xff]
        %v1757 = vld [vmem:[%s1751 + $0x28] sm:$0xff]
        %v1758 = vld [vmem:[%s1751 + $0x30] sm:$0xff]
        %v1759 = vld [vmem:[%s1751 + $0x38] sm:$0xff]
        %v1760 = vld [vmem:[%s1751 + $0x40] sm:$0xff]
        %v1761 = vld [vmem:[%s1751 + $0x48] sm:$0xff]
        %v1763 = vsel %vm1689, %v1750, 0
        %1765 = vmatpush.msra.mxu0 0.0
        %1766 = vmatpush.msra.mxu0 0.0
        %1767 = vmatpush.msra.mxu0 0.0
        %1768 = vmatpush.msra.mxu0 0.0
        %1769 = vmatpush.msra.mxu0 0.0
        %1770 = vmatpush.msra.mxu0 0.0
        %1771 = vmatpush.msra.mxu0 %v1761
        %1772 = vmatpush.msra.mxu0 %v1760
        %1773 = vmatpush.msra.mxu0 %v1759
        %1774 = vmatpush.msra.mxu0 %v1758
        %1775 = vmatpush.msra.mxu0 %v1757
        %1776 = vmatpush.msra.mxu0 %v1756
        %1777 = vmatpush.msra.mxu0 %v1755
        %1778 = vmatpush.msra.mxu0 %v1754
        %1779 = vmatpush.msra.mxu0 %v1753
        %1780 = vmatpush.msra.mxu0 %v1752
        %1781 = vmatmul.f32.gmra.mxu0 %v1763
        %v1782 = vpop.f32.mrf.mxu0
        %v1783 = vadd.f32 0.0, %v1782
        %1784 = vdwg.mxu0
        %v1785 = vadd.f32 %v1749, %v1783
        %v1786 = vld [vmem:[#allocation3 + $0x3] sm:$0x1]
        %s1787 = scalar_lea.vmem %s9, 240
        %v1788 = vld [vmem:[%s1787] sm:$0xff]
        %v1789 = vld [vmem:[%s1787 + $0x8] sm:$0xff]
        %v1790 = vld [vmem:[%s1787 + $0x10] sm:$0xff]
        %v1791 = vld [vmem:[%s1787 + $0x18] sm:$0xff]
        %v1792 = vld [vmem:[%s1787 + $0x20] sm:$0xff]
        %v1793 = vld [vmem:[%s1787 + $0x28] sm:$0xff]
        %v1794 = vld [vmem:[%s1787 + $0x30] sm:$0xff]
        %v1795 = vld [vmem:[%s1787 + $0x38] sm:$0xff]
        %v1796 = vld [vmem:[%s1787 + $0x40] sm:$0xff]
        %v1797 = vld [vmem:[%s1787 + $0x48] sm:$0xff]
        %v1799 = vsel %vm1689, %v1786, 0
        %1801 = vmatpush.msra.mxu0 0.0
        %1802 = vmatpush.msra.mxu0 0.0
        %1803 = vmatpush.msra.mxu0 0.0
        %1804 = vmatpush.msra.mxu0 0.0
        %1805 = vmatpush.msra.mxu0 0.0
        %1806 = vmatpush.msra.mxu0 0.0
        %1807 = vmatpush.msra.mxu0 %v1797
        %1808 = vmatpush.msra.mxu0 %v1796
        %1809 = vmatpush.msra.mxu0 %v1795
        %1810 = vmatpush.msra.mxu0 %v1794
        %1811 = vmatpush.msra.mxu0 %v1793
        %1812 = vmatpush.msra.mxu0 %v1792
        %1813 = vmatpush.msra.mxu0 %v1791
        %1814 = vmatpush.msra.mxu0 %v1790
        %1815 = vmatpush.msra.mxu0 %v1789
        %1816 = vmatpush.msra.mxu0 %v1788
        %1817 = vmatmul.f32.gmra.mxu0 %v1799
        %v1818 = vpop.f32.mrf.mxu0
        %v1819 = vadd.f32 0.0, %v1818
        %1820 = vdwg.mxu0
        %v1821 = vadd.f32 %v1785, %v1819
        %v1822 = vld [vmem:[#allocation3 + $0x4] sm:$0x1]
        %s1823 = scalar_lea.vmem %s9, 320
        %v1824 = vld [vmem:[%s1823] sm:$0xff]
        %v1825 = vld [vmem:[%s1823 + $0x8] sm:$0xff]
        %v1826 = vld [vmem:[%s1823 + $0x10] sm:$0xff]
        %v1827 = vld [vmem:[%s1823 + $0x18] sm:$0xff]
        %v1828 = vld [vmem:[%s1823 + $0x20] sm:$0xff]
        %v1829 = vld [vmem:[%s1823 + $0x28] sm:$0xff]
        %v1830 = vld [vmem:[%s1823 + $0x30] sm:$0xff]
        %v1831 = vld [vmem:[%s1823 + $0x38] sm:$0xff]
        %v1832 = vld [vmem:[%s1823 + $0x40] sm:$0xff]
        %v1833 = vld [vmem:[%s1823 + $0x48] sm:$0xff]
        %v1835 = vsel %vm1689, %v1822, 0
        %1837 = vmatpush.msra.mxu0 0.0
        %1838 = vmatpush.msra.mxu0 0.0
        %1839 = vmatpush.msra.mxu0 0.0
        %1840 = vmatpush.msra.mxu0 0.0
        %1841 = vmatpush.msra.mxu0 0.0
        %1842 = vmatpush.msra.mxu0 0.0
        %1843 = vmatpush.msra.mxu0 %v1833
        %1844 = vmatpush.msra.mxu0 %v1832
        %1845 = vmatpush.msra.mxu0 %v1831
        %1846 = vmatpush.msra.mxu0 %v1830
        %1847 = vmatpush.msra.mxu0 %v1829
        %1848 = vmatpush.msra.mxu0 %v1828
        %1849 = vmatpush.msra.mxu0 %v1827
        %1850 = vmatpush.msra.mxu0 %v1826
        %1851 = vmatpush.msra.mxu0 %v1825
        %1852 = vmatpush.msra.mxu0 %v1824
        %1853 = vmatmul.f32.gmra.mxu0 %v1835
        %v1854 = vpop.f32.mrf.mxu0
        %v1855 = vadd.f32 0.0, %v1854
        %1856 = vdwg.mxu0
        %v1857 = vadd.f32 %v1821, %v1855
        %v1858 = vld [vmem:[%s11] sm:$0xff]
        %v1859 = vld [vmem:[%s11 + $0x8] sm:$0xff]
        %v1860 = vld [vmem:[%s11 + $0x10] sm:$0xff]
        %v1861 = vld [vmem:[%s11 + $0x18] sm:$0xff]
        %v1862 = vld [vmem:[%s11 + $0x20] sm:$0xff]
        %v1863 = vld [vmem:[%s11 + $0x28] sm:$0xff]
        %v1864 = vld [vmem:[%s11 + $0x30] sm:$0xff]
        %v1865 = vld [vmem:[%s11 + $0x38] sm:$0xff]
        %v1866 = vld [vmem:[%s11 + $0x40] sm:$0xff]
        %v1867 = vld [vmem:[%s11 + $0x48] sm:$0xff]
        %v1868 = vld [vmem:[%s11 + $0x50] sm:$0xff]
        %v1869 = vld [vmem:[%s11 + $0x58] sm:$0xff]
        %v1870 = vld [vmem:[%s11 + $0x60] sm:$0xff]
        %v1871 = vld [vmem:[%s11 + $0x68] sm:$0xff]
        %v1872 = vld [vmem:[%s11 + $0x70] sm:$0xff]
        %v1873 = vld [vmem:[%s11 + $0x78] sm:$0xff]
        %v1874 = vld [vmem:[%s12] sm:$0x1]
        %1875 = vmatpush.msra.mxu0 %v1873
        %1876 = vmatpush.msra.mxu0 %v1872
        %1877 = vmatpush.msra.mxu0 %v1871
        %1878 = vmatpush.msra.mxu0 %v1870
        %1879 = vmatpush.msra.mxu0 %v1869
        %1880 = vmatpush.msra.mxu0 %v1868
        %1881 = vmatpush.msra.mxu0 %v1867
        %1882 = vmatpush.msra.mxu0 %v1866
        %1883 = vmatpush.msra.mxu0 %v1865
        %1884 = vmatpush.msra.mxu0 %v1864
        %1885 = vmatpush.msra.mxu0 %v1863
        %1886 = vmatpush.msra.mxu0 %v1862
        %1887 = vmatpush.msra.mxu0 %v1861
        %1888 = vmatpush.msra.mxu0 %v1860
        %1889 = vmatpush.msra.mxu0 %v1859
        %1890 = vmatpush.msra.mxu0 %v1858
        %1891 = vmatmul.f32.gmra.mxu0 %v1857
        %v1892 = vpop.f32.mrf.mxu0
        %v1893 = vadd.f32 %v1874, %v1892
        %1894 = vdwg.mxu0
        %v1895 = vld [vmem:[%s13] sm:$0xff]
        %v1896 = vld [vmem:[%s13 + $0x8] sm:$0xff]
        %v1897 = vld [vmem:[%s13 + $0x10] sm:$0xff]
        %v1898 = vld [vmem:[%s13 + $0x18] sm:$0xff]
        %v1899 = vld [vmem:[%s13 + $0x20] sm:$0xff]
        %v1900 = vld [vmem:[%s13 + $0x28] sm:$0xff]
        %v1901 = vld [vmem:[%s13 + $0x30] sm:$0xff]
        %v1902 = vld [vmem:[%s13 + $0x38] sm:$0xff]
        %v1903 = vld [vmem:[%s13 + $0x40] sm:$0xff]
        %v1904 = vld [vmem:[%s13 + $0x48] sm:$0xff]
        %v1905 = vld [vmem:[%s13 + $0x50] sm:$0xff]
        %v1906 = vld [vmem:[%s13 + $0x58] sm:$0xff]
        %v1907 = vld [vmem:[%s13 + $0x60] sm:$0xff]
        %v1908 = vld [vmem:[%s13 + $0x68] sm:$0xff]
        %v1909 = vld [vmem:[%s13 + $0x70] sm:$0xff]
        %v1910 = vld [vmem:[%s13 + $0x78] sm:$0xff]
        %v1911 = vld [vmem:[%s14] sm:$0x1]
        %1912 = vmatpush.msra.mxu0 %v1910
        %1913 = vmatpush.msra.mxu0 %v1909
        %1914 = vmatpush.msra.mxu0 %v1908
        %1915 = vmatpush.msra.mxu0 %v1907
        %1916 = vmatpush.msra.mxu0 %v1906
        %1917 = vmatpush.msra.mxu0 %v1905
        %1918 = vmatpush.msra.mxu0 %v1904
        %1919 = vmatpush.msra.mxu0 %v1903
        %1920 = vmatpush.msra.mxu0 %v1902
        %1921 = vmatpush.msra.mxu0 %v1901
        %1922 = vmatpush.msra.mxu0 %v1900
        %1923 = vmatpush.msra.mxu0 %v1899
        %1924 = vmatpush.msra.mxu0 %v1898
        %1925 = vmatpush.msra.mxu0 %v1897
        %1926 = vmatpush.msra.mxu0 %v1896
        %1927 = vmatpush.msra.mxu0 %v1895
        %1928 = vmatmul.f32.gmra.mxu0 %v1893
        %v1929 = vpop.f32.mrf.mxu0
        %v1930 = vadd.f32 %v1911, %v1929
        %1931 = vdwg.mxu0
        %1932 = vst [vmem:[%s486] sm:$0x1] %v1930
        %s1933 = sand.u32 %s357, 1
        %s1934 = scalar_lea.sflag [#allocation5], %s1933
        %s1935 = sand.u32 %s357, 1
        %s1936 = scalar_lea.vmem [#allocation4], %s1935
        // Predicated region
        $region81: #{lenet5_forward.1} parent=79 // pred_check
          %p1937 = pneg %p367
        $region82: #{lenet5_forward.1} parent=79 // pred_check_branch
          %1939 = sbr.rel (%p1937) target = $region84
        $region83: #{lenet5_forward.1} parent=79 // pred_region
          %1941 = vsyncadd %s1934, 0
          %s1942 = scalar_lea.hbm %s15, %s29
          %s1944 = sshll.u32 %s1936, 4
          %s1945 = int_to_ptr.vmem [resolvable:$true] %s1944
          %s1946 = sshll.u32 %s1942, 4
          %s1947 = int_to_ptr.hbm [resolvable:$true] %s1946
          %1949 = dma.vmem_to_hbm [thread:$0]  %s1945, 16, %s1947, %s1934
        $region84: #{lenet5_forward.1} parent=79 // pred_fallthru
          _
      $region80: #{lenet5_forward.1} parent=5 // pred_fallthru
        _
      %p1950 = scmp.le.s32.totalorder 2, %s24
      // Predicated region
      $region85: #{lenet5_forward.1} parent=5 // pred_check
        %p1951 = pneg %p1950
      $region86: #{lenet5_forward.1} parent=5 // pred_check_branch
        %1953 = sbr.rel (%p1951) target = $region88
      $region87: #{lenet5_forward.1} parent=5 // pred_region
        %s1954 = ssub.s32 %s24, 2
        // Predicated region
        $region89: #{lenet5_forward.1} parent=87 // pred_check
          %p1955 = pneg %p373
        $region90: #{lenet5_forward.1} parent=87 // pred_check_branch
          %1957 = sbr.rel (%p1955) target = $region92
        $region91: #{lenet5_forward.1} parent=87 // pred_region
          %s1958 = sand.u32 %s358, 1
          %s1959 = scalar_lea.sflag [#allocation5], %s1958
          %s1960 = sand.u32 %s358, 1
          %s1961 = scalar_lea.vmem [#allocation4], %s1960
          %1963 = dma.done %s1959, 16
        $region92: #{lenet5_forward.1} parent=87 // pred_fallthru
          _
      $region88: #{lenet5_forward.1} parent=5 // pred_fallthru
        _
    $region6: #{lenet5_forward.1} parent=1 // loop_footer
      %s28 = sadd.s32 1, %s24
    $region7: #{lenet5_forward.1} parent=1 // loop_footer_branch
      %23 = sbr.rel target = $region3
    $region8: #{lenet5_forward.1} parent=1 // loop_exit
      _
    %1964 = vsyncpa [#allocation5], 1
    %s1965 = scalar_lea.sflag [#allocation5], 1
    %1966 = vsyncpa %s1965, 1

</llo_original>
